<compile_context>
chip_gen: v6e
topology: v6e:2x2x1
jax: 0.10.0
libtpu: 0.0.40
codegen_flags: <defaults>
</compile_context>

<pallas_src>
import functools

import jax
import jax.numpy as jnp
import numpy as np
from jax import lax
from jax.experimental import pallas as pl
from jax.experimental.pallas import tpu as pltpu

BN_EPS = 1e-5


def _decoder_block_kernel(x_ref, skip_ref, w_ref, gamma_ref, beta_ref,
                          out_ref,
                          xcol_ref, xsp_ref, a_ref, mask_ref,
                          ssum_ref, ssq_ref,
                          *, H, W, Hh, Wh, Cin, Cpad):
    # x_ref:    (1, Cin, Hh, Wh)   low-res input (NCHW block, one batch element)
    # skip_ref: (1, Cin, H,  W)    skip connection
    # w_ref:    (Cout, 9*Cpad)     packed conv taps, col = (dy*3+dx)*Cpad + cin
    # gamma/beta: (Cout, 1)
    # out_ref:  (B, Cout, H*W)     resident across the whole grid
    # scratch:
    #   xcol_ref: (Cin, Hh, W)     column-upsampled x
    #   xsp_ref:  (Cin, H*W+2W+2)  flat xs with W+1 zeros on each end
    #   a_ref:    (9*Cpad, H*W)    im2col matrix (channel rows padded to 8)
    #   mask_ref: (2, H*W)         left/right horizontal-halo masks
    #   ssum/ssq: (Cout, 1)        running BN moments
    b = pl.program_id(0)
    B = out_ref.shape[0]
    N = H * W

    # ---------------- one-time init on the first grid step ------------------
    @pl.when(b == 0)
    def _init():
        xsp_ref[...] = jnp.zeros_like(xsp_ref)   # halo regions stay zero
        a_ref[...] = jnp.zeros_like(a_ref)       # channel-pad rows stay zero
        ssum_ref[...] = jnp.zeros_like(ssum_ref)
        ssq_ref[...] = jnp.zeros_like(ssq_ref)
        # Horizontal-boundary masks in flat (row-major) spatial coordinates.
        col = lax.broadcasted_iota(jnp.int32, (1, W), 1)
        ml = (col >= 1).astype(jnp.float32)       # column j-1 exists
        mr = (col <= W - 2).astype(jnp.float32)   # column j+1 exists
        for i in range(H):
            mask_ref[0:1, i * W:(i + 1) * W] = ml
            mask_ref[1:2, i * W:(i + 1) * W] = mr

    # ------------- nearest 2x upsample of x (columns via tiny matmul) -------
    # UW[w, j] = 1 iff j // 2 == w  (built without integer division)
    wi = lax.broadcasted_iota(jnp.int32, (Wh, W), 0)
    ji = lax.broadcasted_iota(jnp.int32, (Wh, W), 1)
    d = ji - 2 * wi
    uw = jnp.logical_and(d >= 0, d <= 1).astype(jnp.float32)        # (Wh, W)

    x2 = x_ref[0].reshape(Cin * Hh, Wh)            # leading-dim collapse only
    xcol_ref[...] = jnp.dot(
        x2, uw, preferred_element_type=jnp.float32).reshape(Cin, Hh, W)

    # -------- fused (row upsample + skip add) into the flat padded buffer ---
    # xsp layout: [ W+1 zeros | xs row 0 | ... | xs row H-1 | W+1 zeros ]
    for i in range(H):
        row = xcol_ref[:, i // 2, :] + skip_ref[0, :, i, :]          # (Cin, W)
        xsp_ref[:, (W + 1) + i * W:(W + 1) + (i + 1) * W] = row

    # ---------------- im2col from 9 statically shifted slices ---------------
    ml = mask_ref[0:1, :]
    mr = mask_ref[1:2, :]
    for dy in range(3):
        for dx in range(3):
            t = dy * 3 + dx
            start = dy * W + dx                       # = (W+1) + (dy-1)W+(dx-1)
            s = xsp_ref[:, start:start + N]                          # (Cin, N)
            if dx == 0:
                s = s * ml
            elif dx == 2:
                s = s * mr
            a_ref[t * Cpad:t * Cpad + Cin, :] = s

    # ------------- single fused conv matmul on the MXU ----------------------
    conv = jnp.dot(w_ref[...], a_ref[...],
                   preferred_element_type=jnp.float32)               # (Cout, N)

    # pre-BN conv straight into the resident output block (lane-dense slab)
    out_ref[b] = conv

    # running per-channel moments for BatchNorm (batch stats over N,H,W)
    ssum_ref[...] += jnp.sum(conv, axis=1, keepdims=True)
    ssq_ref[...] += jnp.sum(conv * conv, axis=1, keepdims=True)

    # ---------- finalize: in-place BN (biased batch variance) + ReLU --------
    @pl.when(b == B - 1)
    def _finalize():
        inv_cnt = 1.0 / (B * N)
        mean = ssum_ref[...] * inv_cnt                               # (Cout, 1)
        var = ssq_ref[...] * inv_cnt - mean * mean
        inv = lax.rsqrt(var + BN_EPS)
        scale = gamma_ref[...] * inv
        shift = beta_ref[...] - mean * scale
        y = out_ref[...] * scale + shift                             # (B, Cout, N)
        out_ref[...] = jnp.maximum(y, 0.0)


def decoder_block(x_in, skip_in, w_oihw, gamma, beta):
    """x_in: (B, Cin, Hh, Wh), skip_in: (B, Cin, 2*Hh, 2*Wh), NCHW like PyTorch.
    Returns (B, Cout, 2*Hh, 2*Wh) in NCHW."""
    B, Cin, Hh, Wh = x_in.shape
    Bs, Cs, H, W = skip_in.shape
    assert Bs == B and Cs == Cin and H == 2 * Hh and W == 2 * Wh
    Cout = w_oihw.shape[0]
    N = H * W
    Cpad = ((Cin + 7) // 8) * 8          # channel rows padded to sublane tile

    # conv taps packed as (Cout, 9*Cpad): w2[o, (dy*3+dx)*Cpad + c] = w[o,c,dy,dx]
    wt = jnp.transpose(w_oihw, (0, 2, 3, 1))                  # (Cout, 3, 3, Cin)
    wt = jnp.pad(wt, ((0, 0), (0, 0), (0, 0), (0, Cpad - Cin)))
    w2 = wt.reshape(Cout, 9 * Cpad).astype(jnp.float32)

    gamma2 = gamma.reshape(Cout, 1).astype(jnp.float32)
    beta2 = beta.reshape(Cout, 1).astype(jnp.float32)

    kernel = functools.partial(_decoder_block_kernel, H=H, W=W, Hh=Hh, Wh=Wh,
                               Cin=Cin, Cpad=Cpad)

    out_flat = pl.pallas_call(
        kernel,
        out_shape=jax.ShapeDtypeStruct((B, Cout, N), jnp.float32),
        grid_spec=pltpu.PrefetchScalarGridSpec(
            num_scalar_prefetch=0,
            grid=(B,),
            in_specs=[
                pl.BlockSpec((1, Cin, Hh, Wh), lambda b: (b, 0, 0, 0)),
                pl.BlockSpec((1, Cin, H, W), lambda b: (b, 0, 0, 0)),
                pl.BlockSpec((Cout, 9 * Cpad), lambda b: (0, 0)),
                pl.BlockSpec((Cout, 1), lambda b: (0, 0)),
                pl.BlockSpec((Cout, 1), lambda b: (0, 0)),
            ],
            # constant index map -> the whole output stays resident in VMEM so
            # the BN finalize pass can revisit it in place on the last step.
            out_specs=pl.BlockSpec((B, Cout, N), lambda b: (0, 0, 0)),
            scratch_shapes=[
                pltpu.VMEM((Cin, Hh, W), jnp.float32),              # xcol
                pltpu.VMEM((Cin, N + 2 * (W + 1)), jnp.float32),    # flat padded xs
                pltpu.VMEM((9 * Cpad, N), jnp.float32),             # im2col
                pltpu.VMEM((2, N), jnp.float32),                    # halo masks
                pltpu.VMEM((Cout, 1), jnp.float32),                 # sum
                pltpu.VMEM((Cout, 1), jnp.float32),                 # sum of squares
            ],
        ),
        # batch axis must be "arbitrary": output is resident and BN couples
        # all batch elements (so it cannot be megacore-sharded as-is).
        compiler_params=pltpu.CompilerParams(
            dimension_semantics=("arbitrary",)),
    )(x_in.astype(jnp.float32), skip_in.astype(jnp.float32), w2, gamma2, beta2)

    # contiguous reshape only (flat spatial index p = i*W + j), no transpose.
    return out_flat.reshape(B, Cout, H, W)


def decoder_block_reference(x_in, skip_in, w_oihw, gamma, beta):
    """Pure-JAX reference (NCHW) for correctness checking."""
    x_up = jnp.repeat(jnp.repeat(x_in, 2, axis=2), 2, axis=3)
    xs = x_up + skip_in
    conv = jax.lax.conv_general_dilated(
        xs, w_oihw, window_strides=(1, 1), padding='SAME',
        dimension_numbers=('NCHW', 'OIHW', 'NCHW'))
    mean = conv.mean(axis=(0, 2, 3), keepdims=True)
    var = ((conv - mean) ** 2).mean(axis=(0, 2, 3), keepdims=True)
    y = (conv - mean) * jax.lax.rsqrt(var + BN_EPS)
    y = y * gamma.reshape(1, -1, 1, 1) + beta.reshape(1, -1, 1, 1)
    return jnp.maximum(y, 0.0)


if __name__ == "__main__":
    key = jax.random.PRNGKey(0)
    k1, k2, k3, k4, k5 = jax.random.split(key, 5)

    # small shapes consistent with the module: x_chn_in == skip_chn_in = 4,
    # chn_out = 8; skip spatial dims are 2x of x (decoder upsampling path).
    B, Cin, Hh, Wh, Cout = 2, 4, 8, 8, 8
    x_in = jax.random.normal(k1, (B, Cin, Hh, Wh), jnp.float32)
    skip_in = jax.random.normal(k2, (B, Cin, 2 * Hh, 2 * Wh), jnp.float32)

    # deterministic parameter init (conv weight ~ kaiming-ish scale, BN affine)
    fan_in = Cin * 3 * 3
    w = jax.random.normal(k3, (Cout, Cin, 3, 3), jnp.float32) / np.sqrt(fan_in)
    gamma = 1.0 + 0.1 * jax.random.normal(k4, (Cout,), jnp.float32)
    beta = 0.1 * jax.random.normal(k5, (Cout,), jnp.float32)

    out = decoder_block(x_in, skip_in, w, gamma, beta)
    out = jax.block_until_ready(out)

    ref = decoder_block_reference(x_in, skip_in, w, gamma, beta)
    np.testing.assert_allclose(np.asarray(out), np.asarray(ref),
                               rtol=1e-4, atol=1e-4)
    print("KERNEL_OK")
</pallas_src>

<mosaic_0001>
module attributes {stable_mosaic.version = 11 : i64} {
  func.func @_decoder_block_kernel(%arg0: i32, %arg1: memref<1x4x8x8xf32, #tpu.memory_space<vmem>>, %arg2: memref<1x4x16x16xf32, #tpu.memory_space<vmem>>, %arg3: memref<8x72xf32, #tpu.memory_space<vmem>>, %arg4: memref<8x1xf32, #tpu.memory_space<vmem>>, %arg5: memref<8x1xf32, #tpu.memory_space<vmem>>, %arg6: memref<2x8x256xf32, #tpu.memory_space<vmem>>, %arg7: memref<4x8x16xf32, #tpu.memory_space<vmem>>, %arg8: memref<4x290xf32, #tpu.memory_space<vmem>>, %arg9: memref<72x256xf32, #tpu.memory_space<vmem>>, %arg10: memref<2x256xf32, #tpu.memory_space<vmem>>, %arg11: memref<8x1xf32, #tpu.memory_space<vmem>>, %arg12: memref<8x1xf32, #tpu.memory_space<vmem>>) attributes {dimension_semantics = [#tpu.dimension_semantics<arbitrary>], iteration_bounds = array<i64: 2>, scalar_prefetch = 0 : i64, scratch_operands = 6 : i64, tpu.core_type = #tpu.core_type<tc>, window_params = [{transform_indices = @transform_0, window_bounds = array<i64: 1, 4, 8, 8>}, {transform_indices = @transform_1, window_bounds = array<i64: 1, 4, 16, 16>}, {pipeline_mode = #tpu.pipeline_mode<synchronous>, transform_indices = @transform_2, window_bounds = array<i64: 8, 72>}, {pipeline_mode = #tpu.pipeline_mode<synchronous>, transform_indices = @transform_3, window_bounds = array<i64: 8, 1>}, {pipeline_mode = #tpu.pipeline_mode<synchronous>, transform_indices = @transform_4, window_bounds = array<i64: 8, 1>}, {pipeline_mode = #tpu.pipeline_mode<synchronous>, transform_indices = @transform_5, window_bounds = array<i64: 2, 8, 256>}]} {
    %c0_i32 = arith.constant 0 : i32
    %0 = arith.cmpi eq, %arg0, %c0_i32 : i32
    %1 = arith.extui %0 : i1 to i32
    %c0_i32_0 = arith.constant 0 : i32
    %2 = arith.cmpi ne, %1, %c0_i32_0 : i32
    scf.if %2 {
      %cst_171 = arith.constant 0.000000e+00 : f32
      %170 = vector.broadcast %cst_171 : f32 to vector<4x290xf32>
      %c0_172 = arith.constant 0 : index
      %c0_173 = arith.constant 0 : index
      %171 = vector.load %arg8[%c0_172, %c0_173] : memref<4x290xf32, #tpu.memory_space<vmem>>, vector<4x290xf32>
      tpu.vector_store %arg8[%c0_172, %c0_173], %170 {strides = array<i32>} : memref<4x290xf32, #tpu.memory_space<vmem>>, vector<4x290xf32>,
      %cst_174 = arith.constant 0.000000e+00 : f32
      %172 = vector.broadcast %cst_174 : f32 to vector<72x256xf32>
      %c0_175 = arith.constant 0 : index
      %c0_176 = arith.constant 0 : index
      %173 = vector.load %arg9[%c0_175, %c0_176] : memref<72x256xf32, #tpu.memory_space<vmem>>, vector<72x256xf32>
      tpu.vector_store %arg9[%c0_175, %c0_176], %172 {strides = array<i32>} : memref<72x256xf32, #tpu.memory_space<vmem>>, vector<72x256xf32>,
      %cst_177 = arith.constant 0.000000e+00 : f32
      %174 = vector.broadcast %cst_177 : f32 to vector<8x1xf32>
      %c0_178 = arith.constant 0 : index
      %c0_179 = arith.constant 0 : index
      %175 = vector.load %arg11[%c0_178, %c0_179] : memref<8x1xf32, #tpu.memory_space<vmem>>, vector<8x1xf32>
      tpu.vector_store %arg11[%c0_178, %c0_179], %174 {strides = array<i32>} : memref<8x1xf32, #tpu.memory_space<vmem>>, vector<8x1xf32>,
      %cst_180 = arith.constant 0.000000e+00 : f32
      %176 = vector.broadcast %cst_180 : f32 to vector<8x1xf32>
      %c0_181 = arith.constant 0 : index
      %c0_182 = arith.constant 0 : index
      %177 = vector.load %arg12[%c0_181, %c0_182] : memref<8x1xf32, #tpu.memory_space<vmem>>, vector<8x1xf32>
      tpu.vector_store %arg12[%c0_181, %c0_182], %176 {strides = array<i32>} : memref<8x1xf32, #tpu.memory_space<vmem>>, vector<8x1xf32>,
      %178 = tpu.iota {dimensions = array<i32: 1>} : vector<1x16xi32>
      %c1_i32_183 = arith.constant 1 : i32
      %179 = vector.broadcast %c1_i32_183 : i32 to vector<1x16xi32>
      %180 = arith.cmpi sge, %178, %179 : vector<1x16xi32>
      %181 = arith.extui %180 : vector<1x16xi1> to vector<1x16xi32>
      %182 = arith.sitofp %181 : vector<1x16xi32> to vector<1x16xf32>
      %c14_i32 = arith.constant 14 : i32
      %183 = vector.broadcast %c14_i32 : i32 to vector<1x16xi32>
      %184 = arith.cmpi sle, %178, %183 : vector<1x16xi32>
      %185 = arith.extui %184 : vector<1x16xi1> to vector<1x16xi32>
      %186 = arith.sitofp %185 : vector<1x16xi32> to vector<1x16xf32>
      %c0_184 = arith.constant 0 : index
      %c0_185 = arith.constant 0 : index
      %187 = vector.load %arg10[%c0_184, %c0_185] : memref<2x256xf32, #tpu.memory_space<vmem>>, vector<1x16xf32>
      tpu.vector_store %arg10[%c0_184, %c0_185], %182 {strides = array<i32>} : memref<2x256xf32, #tpu.memory_space<vmem>>, vector<1x16xf32>,
      %c1_186 = arith.constant 1 : index
      %c0_187 = arith.constant 0 : index
      %188 = vector.load %arg10[%c1_186, %c0_187] : memref<2x256xf32, #tpu.memory_space<vmem>>, vector<1x16xf32>
      tpu.vector_store %arg10[%c1_186, %c0_187], %186 {strides = array<i32>} : memref<2x256xf32, #tpu.memory_space<vmem>>, vector<1x16xf32>,
      %c0_188 = arith.constant 0 : index
      %c16_189 = arith.constant 16 : index
      %189 = vector.load %arg10[%c0_188, %c16_189] : memref<2x256xf32, #tpu.memory_space<vmem>>, vector<1x16xf32>
      tpu.vector_store %arg10[%c0_188, %c16_189], %182 {strides = array<i32>} : memref<2x256xf32, #tpu.memory_space<vmem>>, vector<1x16xf32>,
      %c1_190 = arith.constant 1 : index
      %c16_191 = arith.constant 16 : index
      %190 = vector.load %arg10[%c1_190, %c16_191] : memref<2x256xf32, #tpu.memory_space<vmem>>, vector<1x16xf32>
      tpu.vector_store %arg10[%c1_190, %c16_191], %186 {strides = array<i32>} : memref<2x256xf32, #tpu.memory_space<vmem>>, vector<1x16xf32>,
      %c0_192 = arith.constant 0 : index
      %c32_193 = arith.constant 32 : index
      %191 = vector.load %arg10[%c0_192, %c32_193] : memref<2x256xf32, #tpu.memory_space<vmem>>, vector<1x16xf32>
      tpu.vector_store %arg10[%c0_192, %c32_193], %182 {strides = array<i32>} : memref<2x256xf32, #tpu.memory_space<vmem>>, vector<1x16xf32>,
      %c1_194 = arith.constant 1 : index
      %c32_195 = arith.constant 32 : index
      %192 = vector.load %arg10[%c1_194, %c32_195] : memref<2x256xf32, #tpu.memory_space<vmem>>, vector<1x16xf32>
      tpu.vector_store %arg10[%c1_194, %c32_195], %186 {strides = array<i32>} : memref<2x256xf32, #tpu.memory_space<vmem>>, vector<1x16xf32>,
      %c0_196 = arith.constant 0 : index
      %c48_197 = arith.constant 48 : index
      %193 = vector.load %arg10[%c0_196, %c48_197] : memref<2x256xf32, #tpu.memory_space<vmem>>, vector<1x16xf32>
      tpu.vector_store %arg10[%c0_196, %c48_197], %182 {strides = array<i32>} : memref<2x256xf32, #tpu.memory_space<vmem>>, vector<1x16xf32>,
      %c1_198 = arith.constant 1 : index
      %c48_199 = arith.constant 48 : index
      %194 = vector.load %arg10[%c1_198, %c48_199] : memref<2x256xf32, #tpu.memory_space<vmem>>, vector<1x16xf32>
      tpu.vector_store %arg10[%c1_198, %c48_199], %186 {strides = array<i32>} : memref<2x256xf32, #tpu.memory_space<vmem>>, vector<1x16xf32>,
      %c0_200 = arith.constant 0 : index
      %c64_201 = arith.constant 64 : index
      %195 = vector.load %arg10[%c0_200, %c64_201] : memref<2x256xf32, #tpu.memory_space<vmem>>, vector<1x16xf32>
      tpu.vector_store %arg10[%c0_200, %c64_201], %182 {strides = array<i32>} : memref<2x256xf32, #tpu.memory_space<vmem>>, vector<1x16xf32>,
      %c1_202 = arith.constant 1 : index
      %c64_203 = arith.constant 64 : index
      %196 = vector.load %arg10[%c1_202, %c64_203] : memref<2x256xf32, #tpu.memory_space<vmem>>, vector<1x16xf32>
      tpu.vector_store %arg10[%c1_202, %c64_203], %186 {strides = array<i32>} : memref<2x256xf32, #tpu.memory_space<vmem>>, vector<1x16xf32>,
      %c0_204 = arith.constant 0 : index
      %c80 = arith.constant 80 : index
      %197 = vector.load %arg10[%c0_204, %c80] : memref<2x256xf32, #tpu.memory_space<vmem>>, vector<1x16xf32>
      tpu.vector_store %arg10[%c0_204, %c80], %182 {strides = array<i32>} : memref<2x256xf32, #tpu.memory_space<vmem>>, vector<1x16xf32>,
      %c1_205 = arith.constant 1 : index
      %c80_206 = arith.constant 80 : index
      %198 = vector.load %arg10[%c1_205, %c80_206] : memref<2x256xf32, #tpu.memory_space<vmem>>, vector<1x16xf32>
      tpu.vector_store %arg10[%c1_205, %c80_206], %186 {strides = array<i32>} : memref<2x256xf32, #tpu.memory_space<vmem>>, vector<1x16xf32>,
      %c0_207 = arith.constant 0 : index
      %c96 = arith.constant 96 : index
      %199 = vector.load %arg10[%c0_207, %c96] : memref<2x256xf32, #tpu.memory_space<vmem>>, vector<1x16xf32>
      tpu.vector_store %arg10[%c0_207, %c96], %182 {strides = array<i32>} : memref<2x256xf32, #tpu.memory_space<vmem>>, vector<1x16xf32>,
      %c1_208 = arith.constant 1 : index
      %c96_209 = arith.constant 96 : index
      %200 = vector.load %arg10[%c1_208, %c96_209] : memref<2x256xf32, #tpu.memory_space<vmem>>, vector<1x16xf32>
      tpu.vector_store %arg10[%c1_208, %c96_209], %186 {strides = array<i32>} : memref<2x256xf32, #tpu.memory_space<vmem>>, vector<1x16xf32>,
      %c0_210 = arith.constant 0 : index
      %c112 = arith.constant 112 : index
      %201 = vector.load %arg10[%c0_210, %c112] : memref<2x256xf32, #tpu.memory_space<vmem>>, vector<1x16xf32>
      tpu.vector_store %arg10[%c0_210, %c112], %182 {strides = array<i32>} : memref<2x256xf32, #tpu.memory_space<vmem>>, vector<1x16xf32>,
      %c1_211 = arith.constant 1 : index
      %c112_212 = arith.constant 112 : index
      %202 = vector.load %arg10[%c1_211, %c112_212] : memref<2x256xf32, #tpu.memory_space<vmem>>, vector<1x16xf32>
      tpu.vector_store %arg10[%c1_211, %c112_212], %186 {strides = array<i32>} : memref<2x256xf32, #tpu.memory_space<vmem>>, vector<1x16xf32>,
      %c0_213 = arith.constant 0 : index
      %c128 = arith.constant 128 : index
      %203 = vector.load %arg10[%c0_213, %c128] : memref<2x256xf32, #tpu.memory_space<vmem>>, vector<1x16xf32>
      tpu.vector_store %arg10[%c0_213, %c128], %182 {strides = array<i32>} : memref<2x256xf32, #tpu.memory_space<vmem>>, vector<1x16xf32>,
      %c1_214 = arith.constant 1 : index
      %c128_215 = arith.constant 128 : index
      %204 = vector.load %arg10[%c1_214, %c128_215] : memref<2x256xf32, #tpu.memory_space<vmem>>, vector<1x16xf32>
      tpu.vector_store %arg10[%c1_214, %c128_215], %186 {strides = array<i32>} : memref<2x256xf32, #tpu.memory_space<vmem>>, vector<1x16xf32>,
      %c0_216 = arith.constant 0 : index
      %c144 = arith.constant 144 : index
      %205 = vector.load %arg10[%c0_216, %c144] : memref<2x256xf32, #tpu.memory_space<vmem>>, vector<1x16xf32>
      tpu.vector_store %arg10[%c0_216, %c144], %182 {strides = array<i32>} : memref<2x256xf32, #tpu.memory_space<vmem>>, vector<1x16xf32>,
      %c1_217 = arith.constant 1 : index
      %c144_218 = arith.constant 144 : index
      %206 = vector.load %arg10[%c1_217, %c144_218] : memref<2x256xf32, #tpu.memory_space<vmem>>, vector<1x16xf32>
      tpu.vector_store %arg10[%c1_217, %c144_218], %186 {strides = array<i32>} : memref<2x256xf32, #tpu.memory_space<vmem>>, vector<1x16xf32>,
      %c0_219 = arith.constant 0 : index
      %c160 = arith.constant 160 : index
      %207 = vector.load %arg10[%c0_219, %c160] : memref<2x256xf32, #tpu.memory_space<vmem>>, vector<1x16xf32>
      tpu.vector_store %arg10[%c0_219, %c160], %182 {strides = array<i32>} : memref<2x256xf32, #tpu.memory_space<vmem>>, vector<1x16xf32>,
      %c1_220 = arith.constant 1 : index
      %c160_221 = arith.constant 160 : index
      %208 = vector.load %arg10[%c1_220, %c160_221] : memref<2x256xf32, #tpu.memory_space<vmem>>, vector<1x16xf32>
      tpu.vector_store %arg10[%c1_220, %c160_221], %186 {strides = array<i32>} : memref<2x256xf32, #tpu.memory_space<vmem>>, vector<1x16xf32>,
      %c0_222 = arith.constant 0 : index
      %c176 = arith.constant 176 : index
      %209 = vector.load %arg10[%c0_222, %c176] : memref<2x256xf32, #tpu.memory_space<vmem>>, vector<1x16xf32>
      tpu.vector_store %arg10[%c0_222, %c176], %182 {strides = array<i32>} : memref<2x256xf32, #tpu.memory_space<vmem>>, vector<1x16xf32>,
      %c1_223 = arith.constant 1 : index
      %c176_224 = arith.constant 176 : index
      %210 = vector.load %arg10[%c1_223, %c176_224] : memref<2x256xf32, #tpu.memory_space<vmem>>, vector<1x16xf32>
      tpu.vector_store %arg10[%c1_223, %c176_224], %186 {strides = array<i32>} : memref<2x256xf32, #tpu.memory_space<vmem>>, vector<1x16xf32>,
      %c0_225 = arith.constant 0 : index
      %c192 = arith.constant 192 : index
      %211 = vector.load %arg10[%c0_225, %c192] : memref<2x256xf32, #tpu.memory_space<vmem>>, vector<1x16xf32>
      tpu.vector_store %arg10[%c0_225, %c192], %182 {strides = array<i32>} : memref<2x256xf32, #tpu.memory_space<vmem>>, vector<1x16xf32>,
      %c1_226 = arith.constant 1 : index
      %c192_227 = arith.constant 192 : index
      %212 = vector.load %arg10[%c1_226, %c192_227] : memref<2x256xf32, #tpu.memory_space<vmem>>, vector<1x16xf32>
      tpu.vector_store %arg10[%c1_226, %c192_227], %186 {strides = array<i32>} : memref<2x256xf32, #tpu.memory_space<vmem>>, vector<1x16xf32>,
      %c0_228 = arith.constant 0 : index
      %c208 = arith.constant 208 : index
      %213 = vector.load %arg10[%c0_228, %c208] : memref<2x256xf32, #tpu.memory_space<vmem>>, vector<1x16xf32>
      tpu.vector_store %arg10[%c0_228, %c208], %182 {strides = array<i32>} : memref<2x256xf32, #tpu.memory_space<vmem>>, vector<1x16xf32>,
      %c1_229 = arith.constant 1 : index
      %c208_230 = arith.constant 208 : index
      %214 = vector.load %arg10[%c1_229, %c208_230] : memref<2x256xf32, #tpu.memory_space<vmem>>, vector<1x16xf32>
      tpu.vector_store %arg10[%c1_229, %c208_230], %186 {strides = array<i32>} : memref<2x256xf32, #tpu.memory_space<vmem>>, vector<1x16xf32>,
      %c0_231 = arith.constant 0 : index
      %c224 = arith.constant 224 : index
      %215 = vector.load %arg10[%c0_231, %c224] : memref<2x256xf32, #tpu.memory_space<vmem>>, vector<1x16xf32>
      tpu.vector_store %arg10[%c0_231, %c224], %182 {strides = array<i32>} : memref<2x256xf32, #tpu.memory_space<vmem>>, vector<1x16xf32>,
      %c1_232 = arith.constant 1 : index
      %c224_233 = arith.constant 224 : index
      %216 = vector.load %arg10[%c1_232, %c224_233] : memref<2x256xf32, #tpu.memory_space<vmem>>, vector<1x16xf32>
      tpu.vector_store %arg10[%c1_232, %c224_233], %186 {strides = array<i32>} : memref<2x256xf32, #tpu.memory_space<vmem>>, vector<1x16xf32>,
      %c0_234 = arith.constant 0 : index
      %c240 = arith.constant 240 : index
      %217 = vector.load %arg10[%c0_234, %c240] : memref<2x256xf32, #tpu.memory_space<vmem>>, vector<1x16xf32>
      tpu.vector_store %arg10[%c0_234, %c240], %182 {strides = array<i32>} : memref<2x256xf32, #tpu.memory_space<vmem>>, vector<1x16xf32>,
      %c1_235 = arith.constant 1 : index
      %c240_236 = arith.constant 240 : index
      %218 = vector.load %arg10[%c1_235, %c240_236] : memref<2x256xf32, #tpu.memory_space<vmem>>, vector<1x16xf32>
      tpu.vector_store %arg10[%c1_235, %c240_236], %186 {strides = array<i32>} : memref<2x256xf32, #tpu.memory_space<vmem>>, vector<1x16xf32>,
    } else {
    }
    %3 = tpu.iota {dimensions = array<i32: 0>} : vector<8x16xi32>
    %4 = tpu.iota {dimensions = array<i32: 1>} : vector<8x16xi32>
    %c2_i32 = arith.constant 2 : i32
    %5 = vector.broadcast %c2_i32 : i32 to vector<8x16xi32>
    %6 = arith.muli %5, %3 : vector<8x16xi32>
    %7 = arith.subi %4, %6 : vector<8x16xi32>
    %c0_i32_1 = arith.constant 0 : i32
    %8 = vector.broadcast %c0_i32_1 : i32 to vector<8x16xi32>
    %9 = arith.cmpi sge, %7, %8 : vector<8x16xi32>
    %c1_i32 = arith.constant 1 : i32
    %10 = vector.broadcast %c1_i32 : i32 to vector<8x16xi32>
    %11 = arith.cmpi sle, %7, %10 : vector<8x16xi32>
    %12 = arith.andi %9, %11 : vector<8x16xi1>
    %13 = arith.extui %12 : vector<8x16xi1> to vector<8x16xi32>
    %14 = arith.sitofp %13 : vector<8x16xi32> to vector<8x16xf32>
    %c0 = arith.constant 0 : index
    %c0_2 = arith.constant 0 : index
    %c0_3 = arith.constant 0 : index
    %c0_4 = arith.constant 0 : index
    %15 = vector.load %arg1[%c0, %c0_2, %c0_3, %c0_4] : memref<1x4x8x8xf32, #tpu.memory_space<vmem>>, vector<1x4x8x8xf32>
    %16 = vector.shape_cast %15 : vector<1x4x8x8xf32> to vector<4x8x8xf32>
    %17 = vector.shape_cast %16 : vector<4x8x8xf32> to vector<32x8xf32>
    %cst = arith.constant dense<0.000000e+00> : vector<32x16xf32>
    %18 = tpu.matmul %17, %14, %cst {dimension_numbers = #tpu.dot_dimension_numbers<[1], [0], [0], [1], [0, 0, 1, 1], [], []>} : vector<32x8xf32>, vector<8x16xf32>, vector<32x16xf32> -> vector<32x16xf32>
    %19 = vector.shape_cast %18 : vector<32x16xf32> to vector<4x8x16xf32>
    %c0_5 = arith.constant 0 : index
    %c0_6 = arith.constant 0 : index
    %c0_7 = arith.constant 0 : index
    %20 = vector.load %arg7[%c0_5, %c0_6, %c0_7] : memref<4x8x16xf32, #tpu.memory_space<vmem>>, vector<4x8x16xf32>
    tpu.vector_store %arg7[%c0_5, %c0_6, %c0_7], %19 {strides = array<i32>} : memref<4x8x16xf32, #tpu.memory_space<vmem>>, vector<4x8x16xf32>,
    %c0_8 = arith.constant 0 : index
    %c0_9 = arith.constant 0 : index
    %c0_10 = arith.constant 0 : index
    %21 = vector.load %arg7[%c0_8, %c0_9, %c0_10] : memref<4x8x16xf32, #tpu.memory_space<vmem>>, vector<4x1x16xf32>
    %22 = vector.shape_cast %21 : vector<4x1x16xf32> to vector<4x16xf32>
    %c0_11 = arith.constant 0 : index
    %c0_12 = arith.constant 0 : index
    %c0_13 = arith.constant 0 : index
    %c0_14 = arith.constant 0 : index
    %23 = vector.load %arg2[%c0_11, %c0_12, %c0_13, %c0_14] : memref<1x4x16x16xf32, #tpu.memory_space<vmem>>, vector<1x4x1x16xf32>
    %24 = vector.shape_cast %23 : vector<1x4x1x16xf32> to vector<4x16xf32>
    %25 = arith.addf %22, %24 : vector<4x16xf32>
    %c0_15 = arith.constant 0 : index
    %c17 = arith.constant 17 : index
    %26 = vector.load %arg8[%c0_15, %c17] : memref<4x290xf32, #tpu.memory_space<vmem>>, vector<4x16xf32>
    tpu.vector_store %arg8[%c0_15, %c17], %25 {strides = array<i32>} : memref<4x290xf32, #tpu.memory_space<vmem>>, vector<4x16xf32>,
    %c0_16 = arith.constant 0 : index
    %c0_17 = arith.constant 0 : index
    %c0_18 = arith.constant 0 : index
    %27 = vector.load %arg7[%c0_16, %c0_17, %c0_18] : memref<4x8x16xf32, #tpu.memory_space<vmem>>, vector<4x1x16xf32>
    %28 = vector.shape_cast %27 : vector<4x1x16xf32> to vector<4x16xf32>
    %c0_19 = arith.constant 0 : index
    %c0_20 = arith.constant 0 : index
    %c1 = arith.constant 1 : index
    %c0_21 = arith.constant 0 : index
    %29 = vector.load %arg2[%c0_19, %c0_20, %c1, %c0_21] : memref<1x4x16x16xf32, #tpu.memory_space<vmem>>, vector<1x4x1x16xf32>
    %30 = vector.shape_cast %29 : vector<1x4x1x16xf32> to vector<4x16xf32>
    %31 = arith.addf %28, %30 : vector<4x16xf32>
    %c0_22 = arith.constant 0 : index
    %c33 = arith.constant 33 : index
    %32 = vector.load %arg8[%c0_22, %c33] : memref<4x290xf32, #tpu.memory_space<vmem>>, vector<4x16xf32>
    tpu.vector_store %arg8[%c0_22, %c33], %31 {strides = array<i32>} : memref<4x290xf32, #tpu.memory_space<vmem>>, vector<4x16xf32>,
    %c0_23 = arith.constant 0 : index
    %c1_24 = arith.constant 1 : index
    %c0_25 = arith.constant 0 : index
    %33 = vector.load %arg7[%c0_23, %c1_24, %c0_25] : memref<4x8x16xf32, #tpu.memory_space<vmem>>, vector<4x1x16xf32>
    %34 = vector.shape_cast %33 : vector<4x1x16xf32> to vector<4x16xf32>
    %c0_26 = arith.constant 0 : index
    %c0_27 = arith.constant 0 : index
    %c2 = arith.constant 2 : index
    %c0_28 = arith.constant 0 : index
    %35 = vector.load %arg2[%c0_26, %c0_27, %c2, %c0_28] : memref<1x4x16x16xf32, #tpu.memory_space<vmem>>, vector<1x4x1x16xf32>
    %36 = vector.shape_cast %35 : vector<1x4x1x16xf32> to vector<4x16xf32>
    %37 = arith.addf %34, %36 : vector<4x16xf32>
    %c0_29 = arith.constant 0 : index
    %c49 = arith.constant 49 : index
    %38 = vector.load %arg8[%c0_29, %c49] : memref<4x290xf32, #tpu.memory_space<vmem>>, vector<4x16xf32>
    tpu.vector_store %arg8[%c0_29, %c49], %37 {strides = array<i32>} : memref<4x290xf32, #tpu.memory_space<vmem>>, vector<4x16xf32>,
    %c0_30 = arith.constant 0 : index
    %c1_31 = arith.constant 1 : index
    %c0_32 = arith.constant 0 : index
    %39 = vector.load %arg7[%c0_30, %c1_31, %c0_32] : memref<4x8x16xf32, #tpu.memory_space<vmem>>, vector<4x1x16xf32>
    %40 = vector.shape_cast %39 : vector<4x1x16xf32> to vector<4x16xf32>
    %c0_33 = arith.constant 0 : index
    %c0_34 = arith.constant 0 : index
    %c3 = arith.constant 3 : index
    %c0_35 = arith.constant 0 : index
    %41 = vector.load %arg2[%c0_33, %c0_34, %c3, %c0_35] : memref<1x4x16x16xf32, #tpu.memory_space<vmem>>, vector<1x4x1x16xf32>
    %42 = vector.shape_cast %41 : vector<1x4x1x16xf32> to vector<4x16xf32>
    %43 = arith.addf %40, %42 : vector<4x16xf32>
    %c0_36 = arith.constant 0 : index
    %c65 = arith.constant 65 : index
    %44 = vector.load %arg8[%c0_36, %c65] : memref<4x290xf32, #tpu.memory_space<vmem>>, vector<4x16xf32>
    tpu.vector_store %arg8[%c0_36, %c65], %43 {strides = array<i32>} : memref<4x290xf32, #tpu.memory_space<vmem>>, vector<4x16xf32>,
    %c0_37 = arith.constant 0 : index
    %c2_38 = arith.constant 2 : index
    %c0_39 = arith.constant 0 : index
    %45 = vector.load %arg7[%c0_37, %c2_38, %c0_39] : memref<4x8x16xf32, #tpu.memory_space<vmem>>, vector<4x1x16xf32>
    %46 = vector.shape_cast %45 : vector<4x1x16xf32> to vector<4x16xf32>
    %c0_40 = arith.constant 0 : index
    %c0_41 = arith.constant 0 : index
    %c4 = arith.constant 4 : index
    %c0_42 = arith.constant 0 : index
    %47 = vector.load %arg2[%c0_40, %c0_41, %c4, %c0_42] : memref<1x4x16x16xf32, #tpu.memory_space<vmem>>, vector<1x4x1x16xf32>
    %48 = vector.shape_cast %47 : vector<1x4x1x16xf32> to vector<4x16xf32>
    %49 = arith.addf %46, %48 : vector<4x16xf32>
    %c0_43 = arith.constant 0 : index
    %c81 = arith.constant 81 : index
    %50 = vector.load %arg8[%c0_43, %c81] : memref<4x290xf32, #tpu.memory_space<vmem>>, vector<4x16xf32>
    tpu.vector_store %arg8[%c0_43, %c81], %49 {strides = array<i32>} : memref<4x290xf32, #tpu.memory_space<vmem>>, vector<4x16xf32>,
    %c0_44 = arith.constant 0 : index
    %c2_45 = arith.constant 2 : index
    %c0_46 = arith.constant 0 : index
    %51 = vector.load %arg7[%c0_44, %c2_45, %c0_46] : memref<4x8x16xf32, #tpu.memory_space<vmem>>, vector<4x1x16xf32>
    %52 = vector.shape_cast %51 : vector<4x1x16xf32> to vector<4x16xf32>
    %c0_47 = arith.constant 0 : index
    %c0_48 = arith.constant 0 : index
    %c5 = arith.constant 5 : index
    %c0_49 = arith.constant 0 : index
    %53 = vector.load %arg2[%c0_47, %c0_48, %c5, %c0_49] : memref<1x4x16x16xf32, #tpu.memory_space<vmem>>, vector<1x4x1x16xf32>
    %54 = vector.shape_cast %53 : vector<1x4x1x16xf32> to vector<4x16xf32>
    %55 = arith.addf %52, %54 : vector<4x16xf32>
    %c0_50 = arith.constant 0 : index
    %c97 = arith.constant 97 : index
    %56 = vector.load %arg8[%c0_50, %c97] : memref<4x290xf32, #tpu.memory_space<vmem>>, vector<4x16xf32>
    tpu.vector_store %arg8[%c0_50, %c97], %55 {strides = array<i32>} : memref<4x290xf32, #tpu.memory_space<vmem>>, vector<4x16xf32>,
    %c0_51 = arith.constant 0 : index
    %c3_52 = arith.constant 3 : index
    %c0_53 = arith.constant 0 : index
    %57 = vector.load %arg7[%c0_51, %c3_52, %c0_53] : memref<4x8x16xf32, #tpu.memory_space<vmem>>, vector<4x1x16xf32>
    %58 = vector.shape_cast %57 : vector<4x1x16xf32> to vector<4x16xf32>
    %c0_54 = arith.constant 0 : index
    %c0_55 = arith.constant 0 : index
    %c6 = arith.constant 6 : index
    %c0_56 = arith.constant 0 : index
    %59 = vector.load %arg2[%c0_54, %c0_55, %c6, %c0_56] : memref<1x4x16x16xf32, #tpu.memory_space<vmem>>, vector<1x4x1x16xf32>
    %60 = vector.shape_cast %59 : vector<1x4x1x16xf32> to vector<4x16xf32>
    %61 = arith.addf %58, %60 : vector<4x16xf32>
    %c0_57 = arith.constant 0 : index
    %c113 = arith.constant 113 : index
    %62 = vector.load %arg8[%c0_57, %c113] : memref<4x290xf32, #tpu.memory_space<vmem>>, vector<4x16xf32>
    tpu.vector_store %arg8[%c0_57, %c113], %61 {strides = array<i32>} : memref<4x290xf32, #tpu.memory_space<vmem>>, vector<4x16xf32>,
    %c0_58 = arith.constant 0 : index
    %c3_59 = arith.constant 3 : index
    %c0_60 = arith.constant 0 : index
    %63 = vector.load %arg7[%c0_58, %c3_59, %c0_60] : memref<4x8x16xf32, #tpu.memory_space<vmem>>, vector<4x1x16xf32>
    %64 = vector.shape_cast %63 : vector<4x1x16xf32> to vector<4x16xf32>
    %c0_61 = arith.constant 0 : index
    %c0_62 = arith.constant 0 : index
    %c7 = arith.constant 7 : index
    %c0_63 = arith.constant 0 : index
    %65 = vector.load %arg2[%c0_61, %c0_62, %c7, %c0_63] : memref<1x4x16x16xf32, #tpu.memory_space<vmem>>, vector<1x4x1x16xf32>
    %66 = vector.shape_cast %65 : vector<1x4x1x16xf32> to vector<4x16xf32>
    %67 = arith.addf %64, %66 : vector<4x16xf32>
    %c0_64 = arith.constant 0 : index
    %c129 = arith.constant 129 : index
    %68 = vector.load %arg8[%c0_64, %c129] : memref<4x290xf32, #tpu.memory_space<vmem>>, vector<4x16xf32>
    tpu.vector_store %arg8[%c0_64, %c129], %67 {strides = array<i32>} : memref<4x290xf32, #tpu.memory_space<vmem>>, vector<4x16xf32>,
    %c0_65 = arith.constant 0 : index
    %c4_66 = arith.constant 4 : index
    %c0_67 = arith.constant 0 : index
    %69 = vector.load %arg7[%c0_65, %c4_66, %c0_67] : memref<4x8x16xf32, #tpu.memory_space<vmem>>, vector<4x1x16xf32>
    %70 = vector.shape_cast %69 : vector<4x1x16xf32> to vector<4x16xf32>
    %c0_68 = arith.constant 0 : index
    %c0_69 = arith.constant 0 : index
    %c8 = arith.constant 8 : index
    %c0_70 = arith.constant 0 : index
    %71 = vector.load %arg2[%c0_68, %c0_69, %c8, %c0_70] : memref<1x4x16x16xf32, #tpu.memory_space<vmem>>, vector<1x4x1x16xf32>
    %72 = vector.shape_cast %71 : vector<1x4x1x16xf32> to vector<4x16xf32>
    %73 = arith.addf %70, %72 : vector<4x16xf32>
    %c0_71 = arith.constant 0 : index
    %c145 = arith.constant 145 : index
    %74 = vector.load %arg8[%c0_71, %c145] : memref<4x290xf32, #tpu.memory_space<vmem>>, vector<4x16xf32>
    tpu.vector_store %arg8[%c0_71, %c145], %73 {strides = array<i32>} : memref<4x290xf32, #tpu.memory_space<vmem>>, vector<4x16xf32>,
    %c0_72 = arith.constant 0 : index
    %c4_73 = arith.constant 4 : index
    %c0_74 = arith.constant 0 : index
    %75 = vector.load %arg7[%c0_72, %c4_73, %c0_74] : memref<4x8x16xf32, #tpu.memory_space<vmem>>, vector<4x1x16xf32>
    %76 = vector.shape_cast %75 : vector<4x1x16xf32> to vector<4x16xf32>
    %c0_75 = arith.constant 0 : index
    %c0_76 = arith.constant 0 : index
    %c9 = arith.constant 9 : index
    %c0_77 = arith.constant 0 : index
    %77 = vector.load %arg2[%c0_75, %c0_76, %c9, %c0_77] : memref<1x4x16x16xf32, #tpu.memory_space<vmem>>, vector<1x4x1x16xf32>
    %78 = vector.shape_cast %77 : vector<1x4x1x16xf32> to vector<4x16xf32>
    %79 = arith.addf %76, %78 : vector<4x16xf32>
    %c0_78 = arith.constant 0 : index
    %c161 = arith.constant 161 : index
    %80 = vector.load %arg8[%c0_78, %c161] : memref<4x290xf32, #tpu.memory_space<vmem>>, vector<4x16xf32>
    tpu.vector_store %arg8[%c0_78, %c161], %79 {strides = array<i32>} : memref<4x290xf32, #tpu.memory_space<vmem>>, vector<4x16xf32>,
    %c0_79 = arith.constant 0 : index
    %c5_80 = arith.constant 5 : index
    %c0_81 = arith.constant 0 : index
    %81 = vector.load %arg7[%c0_79, %c5_80, %c0_81] : memref<4x8x16xf32, #tpu.memory_space<vmem>>, vector<4x1x16xf32>
    %82 = vector.shape_cast %81 : vector<4x1x16xf32> to vector<4x16xf32>
    %c0_82 = arith.constant 0 : index
    %c0_83 = arith.constant 0 : index
    %c10 = arith.constant 10 : index
    %c0_84 = arith.constant 0 : index
    %83 = vector.load %arg2[%c0_82, %c0_83, %c10, %c0_84] : memref<1x4x16x16xf32, #tpu.memory_space<vmem>>, vector<1x4x1x16xf32>
    %84 = vector.shape_cast %83 : vector<1x4x1x16xf32> to vector<4x16xf32>
    %85 = arith.addf %82, %84 : vector<4x16xf32>
    %c0_85 = arith.constant 0 : index
    %c177 = arith.constant 177 : index
    %86 = vector.load %arg8[%c0_85, %c177] : memref<4x290xf32, #tpu.memory_space<vmem>>, vector<4x16xf32>
    tpu.vector_store %arg8[%c0_85, %c177], %85 {strides = array<i32>} : memref<4x290xf32, #tpu.memory_space<vmem>>, vector<4x16xf32>,
    %c0_86 = arith.constant 0 : index
    %c5_87 = arith.constant 5 : index
    %c0_88 = arith.constant 0 : index
    %87 = vector.load %arg7[%c0_86, %c5_87, %c0_88] : memref<4x8x16xf32, #tpu.memory_space<vmem>>, vector<4x1x16xf32>
    %88 = vector.shape_cast %87 : vector<4x1x16xf32> to vector<4x16xf32>
    %c0_89 = arith.constant 0 : index
    %c0_90 = arith.constant 0 : index
    %c11 = arith.constant 11 : index
    %c0_91 = arith.constant 0 : index
    %89 = vector.load %arg2[%c0_89, %c0_90, %c11, %c0_91] : memref<1x4x16x16xf32, #tpu.memory_space<vmem>>, vector<1x4x1x16xf32>
    %90 = vector.shape_cast %89 : vector<1x4x1x16xf32> to vector<4x16xf32>
    %91 = arith.addf %88, %90 : vector<4x16xf32>
    %c0_92 = arith.constant 0 : index
    %c193 = arith.constant 193 : index
    %92 = vector.load %arg8[%c0_92, %c193] : memref<4x290xf32, #tpu.memory_space<vmem>>, vector<4x16xf32>
    tpu.vector_store %arg8[%c0_92, %c193], %91 {strides = array<i32>} : memref<4x290xf32, #tpu.memory_space<vmem>>, vector<4x16xf32>,
    %c0_93 = arith.constant 0 : index
    %c6_94 = arith.constant 6 : index
    %c0_95 = arith.constant 0 : index
    %93 = vector.load %arg7[%c0_93, %c6_94, %c0_95] : memref<4x8x16xf32, #tpu.memory_space<vmem>>, vector<4x1x16xf32>
    %94 = vector.shape_cast %93 : vector<4x1x16xf32> to vector<4x16xf32>
    %c0_96 = arith.constant 0 : index
    %c0_97 = arith.constant 0 : index
    %c12 = arith.constant 12 : index
    %c0_98 = arith.constant 0 : index
    %95 = vector.load %arg2[%c0_96, %c0_97, %c12, %c0_98] : memref<1x4x16x16xf32, #tpu.memory_space<vmem>>, vector<1x4x1x16xf32>
    %96 = vector.shape_cast %95 : vector<1x4x1x16xf32> to vector<4x16xf32>
    %97 = arith.addf %94, %96 : vector<4x16xf32>
    %c0_99 = arith.constant 0 : index
    %c209 = arith.constant 209 : index
    %98 = vector.load %arg8[%c0_99, %c209] : memref<4x290xf32, #tpu.memory_space<vmem>>, vector<4x16xf32>
    tpu.vector_store %arg8[%c0_99, %c209], %97 {strides = array<i32>} : memref<4x290xf32, #tpu.memory_space<vmem>>, vector<4x16xf32>,
    %c0_100 = arith.constant 0 : index
    %c6_101 = arith.constant 6 : index
    %c0_102 = arith.constant 0 : index
    %99 = vector.load %arg7[%c0_100, %c6_101, %c0_102] : memref<4x8x16xf32, #tpu.memory_space<vmem>>, vector<4x1x16xf32>
    %100 = vector.shape_cast %99 : vector<4x1x16xf32> to vector<4x16xf32>
    %c0_103 = arith.constant 0 : index
    %c0_104 = arith.constant 0 : index
    %c13 = arith.constant 13 : index
    %c0_105 = arith.constant 0 : index
    %101 = vector.load %arg2[%c0_103, %c0_104, %c13, %c0_105] : memref<1x4x16x16xf32, #tpu.memory_space<vmem>>, vector<1x4x1x16xf32>
    %102 = vector.shape_cast %101 : vector<1x4x1x16xf32> to vector<4x16xf32>
    %103 = arith.addf %100, %102 : vector<4x16xf32>
    %c0_106 = arith.constant 0 : index
    %c225 = arith.constant 225 : index
    %104 = vector.load %arg8[%c0_106, %c225] : memref<4x290xf32, #tpu.memory_space<vmem>>, vector<4x16xf32>
    tpu.vector_store %arg8[%c0_106, %c225], %103 {strides = array<i32>} : memref<4x290xf32, #tpu.memory_space<vmem>>, vector<4x16xf32>,
    %c0_107 = arith.constant 0 : index
    %c7_108 = arith.constant 7 : index
    %c0_109 = arith.constant 0 : index
    %105 = vector.load %arg7[%c0_107, %c7_108, %c0_109] : memref<4x8x16xf32, #tpu.memory_space<vmem>>, vector<4x1x16xf32>
    %106 = vector.shape_cast %105 : vector<4x1x16xf32> to vector<4x16xf32>
    %c0_110 = arith.constant 0 : index
    %c0_111 = arith.constant 0 : index
    %c14 = arith.constant 14 : index
    %c0_112 = arith.constant 0 : index
    %107 = vector.load %arg2[%c0_110, %c0_111, %c14, %c0_112] : memref<1x4x16x16xf32, #tpu.memory_space<vmem>>, vector<1x4x1x16xf32>
    %108 = vector.shape_cast %107 : vector<1x4x1x16xf32> to vector<4x16xf32>
    %109 = arith.addf %106, %108 : vector<4x16xf32>
    %c0_113 = arith.constant 0 : index
    %c241 = arith.constant 241 : index
    %110 = vector.load %arg8[%c0_113, %c241] : memref<4x290xf32, #tpu.memory_space<vmem>>, vector<4x16xf32>
    tpu.vector_store %arg8[%c0_113, %c241], %109 {strides = array<i32>} : memref<4x290xf32, #tpu.memory_space<vmem>>, vector<4x16xf32>,
    %c0_114 = arith.constant 0 : index
    %c7_115 = arith.constant 7 : index
    %c0_116 = arith.constant 0 : index
    %111 = vector.load %arg7[%c0_114, %c7_115, %c0_116] : memref<4x8x16xf32, #tpu.memory_space<vmem>>, vector<4x1x16xf32>
    %112 = vector.shape_cast %111 : vector<4x1x16xf32> to vector<4x16xf32>
    %c0_117 = arith.constant 0 : index
    %c0_118 = arith.constant 0 : index
    %c15 = arith.constant 15 : index
    %c0_119 = arith.constant 0 : index
    %113 = vector.load %arg2[%c0_117, %c0_118, %c15, %c0_119] : memref<1x4x16x16xf32, #tpu.memory_space<vmem>>, vector<1x4x1x16xf32>
    %114 = vector.shape_cast %113 : vector<1x4x1x16xf32> to vector<4x16xf32>
    %115 = arith.addf %112, %114 : vector<4x16xf32>
    %c0_120 = arith.constant 0 : index
    %c257 = arith.constant 257 : index
    %116 = vector.load %arg8[%c0_120, %c257] : memref<4x290xf32, #tpu.memory_space<vmem>>, vector<4x16xf32>
    tpu.vector_store %arg8[%c0_120, %c257], %115 {strides = array<i32>} : memref<4x290xf32, #tpu.memory_space<vmem>>, vector<4x16xf32>,
    %c0_121 = arith.constant 0 : index
    %c0_122 = arith.constant 0 : index
    %117 = vector.load %arg10[%c0_121, %c0_122] : memref<2x256xf32, #tpu.memory_space<vmem>>, vector<1x256xf32>
    %c1_123 = arith.constant 1 : index
    %c0_124 = arith.constant 0 : index
    %118 = vector.load %arg10[%c1_123, %c0_124] : memref<2x256xf32, #tpu.memory_space<vmem>>, vector<1x256xf32>
    %c0_125 = arith.constant 0 : index
    %c0_126 = arith.constant 0 : index
    %119 = vector.load %arg8[%c0_125, %c0_126] : memref<4x290xf32, #tpu.memory_space<vmem>>, vector<4x256xf32>
    %120 = vector.broadcast %117 : vector<1x256xf32> to vector<4x256xf32>
    %121 = arith.mulf %119, %120 : vector<4x256xf32>
    %c0_127 = arith.constant 0 : index
    %c0_128 = arith.constant 0 : index
    %122 = vector.load %arg9[%c0_127, %c0_128] : memref<72x256xf32, #tpu.memory_space<vmem>>, vector<4x256xf32>
    tpu.vector_store %arg9[%c0_127, %c0_128], %121 {strides = array<i32>} : memref<72x256xf32, #tpu.memory_space<vmem>>, vector<4x256xf32>,
    %c0_129 = arith.constant 0 : index
    %c1_130 = arith.constant 1 : index
    %123 = vector.load %arg8[%c0_129, %c1_130] : memref<4x290xf32, #tpu.memory_space<vmem>>, vector<4x256xf32>
    %c8_131 = arith.constant 8 : index
    %c0_132 = arith.constant 0 : index
    %124 = vector.load %arg9[%c8_131, %c0_132] : memref<72x256xf32, #tpu.memory_space<vmem>>, vector<4x256xf32>
    tpu.vector_store %arg9[%c8_131, %c0_132], %123 {strides = array<i32>} : memref<72x256xf32, #tpu.memory_space<vmem>>, vector<4x256xf32>,
    %c0_133 = arith.constant 0 : index
    %c2_134 = arith.constant 2 : index
    %125 = vector.load %arg8[%c0_133, %c2_134] : memref<4x290xf32, #tpu.memory_space<vmem>>, vector<4x256xf32>
    %126 = vector.broadcast %118 : vector<1x256xf32> to vector<4x256xf32>
    %127 = arith.mulf %125, %126 : vector<4x256xf32>
    %c16 = arith.constant 16 : index
    %c0_135 = arith.constant 0 : index
    %128 = vector.load %arg9[%c16, %c0_135] : memref<72x256xf32, #tpu.memory_space<vmem>>, vector<4x256xf32>
    tpu.vector_store %arg9[%c16, %c0_135], %127 {strides = array<i32>} : memref<72x256xf32, #tpu.memory_space<vmem>>, vector<4x256xf32>,
    %c0_136 = arith.constant 0 : index
    %c16_137 = arith.constant 16 : index
    %129 = vector.load %arg8[%c0_136, %c16_137] : memref<4x290xf32, #tpu.memory_space<vmem>>, vector<4x256xf32>
    %130 = vector.broadcast %117 : vector<1x256xf32> to vector<4x256xf32>
    %131 = arith.mulf %129, %130 : vector<4x256xf32>
    %c24 = arith.constant 24 : index
    %c0_138 = arith.constant 0 : index
    %132 = vector.load %arg9[%c24, %c0_138] : memref<72x256xf32, #tpu.memory_space<vmem>>, vector<4x256xf32>
    tpu.vector_store %arg9[%c24, %c0_138], %131 {strides = array<i32>} : memref<72x256xf32, #tpu.memory_space<vmem>>, vector<4x256xf32>,
    %c0_139 = arith.constant 0 : index
    %c17_140 = arith.constant 17 : index
    %133 = vector.load %arg8[%c0_139, %c17_140] : memref<4x290xf32, #tpu.memory_space<vmem>>, vector<4x256xf32>
    %c32 = arith.constant 32 : index
    %c0_141 = arith.constant 0 : index
    %134 = vector.load %arg9[%c32, %c0_141] : memref<72x256xf32, #tpu.memory_space<vmem>>, vector<4x256xf32>
    tpu.vector_store %arg9[%c32, %c0_141], %133 {strides = array<i32>} : memref<72x256xf32, #tpu.memory_space<vmem>>, vector<4x256xf32>,
    %c0_142 = arith.constant 0 : index
    %c18 = arith.constant 18 : index
    %135 = vector.load %arg8[%c0_142, %c18] : memref<4x290xf32, #tpu.memory_space<vmem>>, vector<4x256xf32>
    %136 = vector.broadcast %118 : vector<1x256xf32> to vector<4x256xf32>
    %137 = arith.mulf %135, %136 : vector<4x256xf32>
    %c40 = arith.constant 40 : index
    %c0_143 = arith.constant 0 : index
    %138 = vector.load %arg9[%c40, %c0_143] : memref<72x256xf32, #tpu.memory_space<vmem>>, vector<4x256xf32>
    tpu.vector_store %arg9[%c40, %c0_143], %137 {strides = array<i32>} : memref<72x256xf32, #tpu.memory_space<vmem>>, vector<4x256xf32>,
    %c0_144 = arith.constant 0 : index
    %c32_145 = arith.constant 32 : index
    %139 = vector.load %arg8[%c0_144, %c32_145] : memref<4x290xf32, #tpu.memory_space<vmem>>, vector<4x256xf32>
    %140 = vector.broadcast %117 : vector<1x256xf32> to vector<4x256xf32>
    %141 = arith.mulf %139, %140 : vector<4x256xf32>
    %c48 = arith.constant 48 : index
    %c0_146 = arith.constant 0 : index
    %142 = vector.load %arg9[%c48, %c0_146] : memref<72x256xf32, #tpu.memory_space<vmem>>, vector<4x256xf32>
    tpu.vector_store %arg9[%c48, %c0_146], %141 {strides = array<i32>} : memref<72x256xf32, #tpu.memory_space<vmem>>, vector<4x256xf32>,
    %c0_147 = arith.constant 0 : index
    %c33_148 = arith.constant 33 : index
    %143 = vector.load %arg8[%c0_147, %c33_148] : memref<4x290xf32, #tpu.memory_space<vmem>>, vector<4x256xf32>
    %c56 = arith.constant 56 : index
    %c0_149 = arith.constant 0 : index
    %144 = vector.load %arg9[%c56, %c0_149] : memref<72x256xf32, #tpu.memory_space<vmem>>, vector<4x256xf32>
    tpu.vector_store %arg9[%c56, %c0_149], %143 {strides = array<i32>} : memref<72x256xf32, #tpu.memory_space<vmem>>, vector<4x256xf32>,
    %c0_150 = arith.constant 0 : index
    %c34 = arith.constant 34 : index
    %145 = vector.load %arg8[%c0_150, %c34] : memref<4x290xf32, #tpu.memory_space<vmem>>, vector<4x256xf32>
    %146 = vector.broadcast %118 : vector<1x256xf32> to vector<4x256xf32>
    %147 = arith.mulf %145, %146 : vector<4x256xf32>
    %c64 = arith.constant 64 : index
    %c0_151 = arith.constant 0 : index
    %148 = vector.load %arg9[%c64, %c0_151] : memref<72x256xf32, #tpu.memory_space<vmem>>, vector<4x256xf32>
    tpu.vector_store %arg9[%c64, %c0_151], %147 {strides = array<i32>} : memref<72x256xf32, #tpu.memory_space<vmem>>, vector<4x256xf32>,
    %c0_152 = arith.constant 0 : index
    %c0_153 = arith.constant 0 : index
    %149 = vector.load %arg3[%c0_152, %c0_153] : memref<8x72xf32, #tpu.memory_space<vmem>>, vector<8x72xf32>
    %c0_154 = arith.constant 0 : index
    %c0_155 = arith.constant 0 : index
    %150 = vector.load %arg9[%c0_154, %c0_155] : memref<72x256xf32, #tpu.memory_space<vmem>>, vector<72x256xf32>
    %cst_156 = arith.constant dense<0.000000e+00> : vector<8x256xf32>
    %151 = tpu.matmul %149, %150, %cst_156 {dimension_numbers = #tpu.dot_dimension_numbers<[1], [0], [0], [1], [0, 0, 1, 1], [], []>} : vector<8x72xf32>, vector<72x256xf32>, vector<8x256xf32> -> vector<8x256xf32>
    %152 = arith.index_cast %arg0 : i32 to index
    %c0_157 = arith.constant 0 : index
    %c0_158 = arith.constant 0 : index
    %153 = vector.load %arg6[%152, %c0_157, %c0_158] : memref<2x8x256xf32, #tpu.memory_space<vmem>>, vector<1x8x256xf32>
    %154 = vector.shape_cast %153 : vector<1x8x256xf32> to vector<8x256xf32>
    %155 = vector.shape_cast %151 : vector<8x256xf32> to vector<1x8x256xf32>
    tpu.vector_store %arg6[%152, %c0_157, %c0_158], %155 {strides = array<i32>} : memref<2x8x256xf32, #tpu.memory_space<vmem>>, vector<1x8x256xf32>,
    %c0_159 = arith.constant 0 : index
    %c0_160 = arith.constant 0 : index
    %156 = vector.load %arg11[%c0_159, %c0_160] : memref<8x1xf32, #tpu.memory_space<vmem>>, vector<8x1xf32>
    %cst_161 = arith.constant dense<0.000000e+00> : vector<8xf32>
    %157 = vector.multi_reduction <add>, %151, %cst_161 [1] : vector<8x256xf32> to vector<8xf32>
    %158 = vector.shape_cast %157 : vector<8xf32> to vector<8x1xf32>
    %159 = arith.addf %156, %158 : vector<8x1xf32>
    %c0_162 = arith.constant 0 : index
    %c0_163 = arith.constant 0 : index
    %160 = vector.load %arg11[%c0_162, %c0_163] : memref<8x1xf32, #tpu.memory_space<vmem>>, vector<8x1xf32>
    tpu.vector_store %arg11[%c0_162, %c0_163], %159 {strides = array<i32>} : memref<8x1xf32, #tpu.memory_space<vmem>>, vector<8x1xf32>,
    %c0_164 = arith.constant 0 : index
    %c0_165 = arith.constant 0 : index
    %161 = vector.load %arg12[%c0_164, %c0_165] : memref<8x1xf32, #tpu.memory_space<vmem>>, vector<8x1xf32>
    %162 = arith.mulf %151, %151 : vector<8x256xf32>
    %cst_166 = arith.constant dense<0.000000e+00> : vector<8xf32>
    %163 = vector.multi_reduction <add>, %162, %cst_166 [1] : vector<8x256xf32> to vector<8xf32>
    %164 = vector.shape_cast %163 : vector<8xf32> to vector<8x1xf32>
    %165 = arith.addf %161, %164 : vector<8x1xf32>
    %c0_167 = arith.constant 0 : index
    %c0_168 = arith.constant 0 : index
    %166 = vector.load %arg12[%c0_167, %c0_168] : memref<8x1xf32, #tpu.memory_space<vmem>>, vector<8x1xf32>
    tpu.vector_store %arg12[%c0_167, %c0_168], %165 {strides = array<i32>} : memref<8x1xf32, #tpu.memory_space<vmem>>, vector<8x1xf32>,
    %c1_i32_169 = arith.constant 1 : i32
    %167 = arith.cmpi eq, %arg0, %c1_i32_169 : i32
    %168 = arith.extui %167 : i1 to i32
    %c0_i32_170 = arith.constant 0 : i32
    %169 = arith.cmpi ne, %168, %c0_i32_170 : i32
    scf.if %169 {
      %c0_171 = arith.constant 0 : index
      %c0_172 = arith.constant 0 : index
      %170 = vector.load %arg11[%c0_171, %c0_172] : memref<8x1xf32, #tpu.memory_space<vmem>>, vector<8x1xf32>
      %cst_173 = arith.constant 0.001953125 : f32
      %171 = vector.broadcast %cst_173 : f32 to vector<8x1xf32>
      %172 = arith.mulf %170, %171 : vector<8x1xf32>
      %c0_174 = arith.constant 0 : index
      %c0_175 = arith.constant 0 : index
      %173 = vector.load %arg12[%c0_174, %c0_175] : memref<8x1xf32, #tpu.memory_space<vmem>>, vector<8x1xf32>
      %cst_176 = arith.constant 0.001953125 : f32
      %174 = vector.broadcast %cst_176 : f32 to vector<8x1xf32>
      %175 = arith.mulf %173, %174 : vector<8x1xf32>
      %176 = arith.mulf %172, %172 : vector<8x1xf32>
      %177 = arith.subf %175, %176 : vector<8x1xf32>
      %cst_177 = arith.constant 9.99999974E-6 : f32
      %178 = vector.broadcast %cst_177 : f32 to vector<8x1xf32>
      %179 = arith.addf %177, %178 : vector<8x1xf32>
      %180 = math.rsqrt %179 : vector<8x1xf32>
      %c0_178 = arith.constant 0 : index
      %c0_179 = arith.constant 0 : index
      %181 = vector.load %arg4[%c0_178, %c0_179] : memref<8x1xf32, #tpu.memory_space<vmem>>, vector<8x1xf32>
      %182 = arith.mulf %181, %180 : vector<8x1xf32>
      %c0_180 = arith.constant 0 : index
      %c0_181 = arith.constant 0 : index
      %183 = vector.load %arg5[%c0_180, %c0_181] : memref<8x1xf32, #tpu.memory_space<vmem>>, vector<8x1xf32>
      %184 = arith.mulf %172, %182 : vector<8x1xf32>
      %185 = arith.subf %183, %184 : vector<8x1xf32>
      %c0_182 = arith.constant 0 : index
      %c0_183 = arith.constant 0 : index
      %c0_184 = arith.constant 0 : index
      %186 = vector.load %arg6[%c0_182, %c0_183, %c0_184] : memref<2x8x256xf32, #tpu.memory_space<vmem>>, vector<2x8x256xf32>
      %187 = vector.shape_cast %182 : vector<8x1xf32> to vector<1x8x1xf32>
      %188 = vector.broadcast %187 : vector<1x8x1xf32> to vector<2x8x256xf32>
      %189 = arith.mulf %186, %188 : vector<2x8x256xf32>
      %190 = vector.shape_cast %185 : vector<8x1xf32> to vector<1x8x1xf32>
      %191 = vector.broadcast %190 : vector<1x8x1xf32> to vector<2x8x256xf32>
      %192 = arith.addf %189, %191 : vector<2x8x256xf32>
      %cst_185 = arith.constant 0.000000e+00 : f32
      %193 = vector.broadcast %cst_185 : f32 to vector<2x8x256xf32>
      %194 = arith.maximumf %192, %193 : vector<2x8x256xf32>
      %c0_186 = arith.constant 0 : index
      %c0_187 = arith.constant 0 : index
      %c0_188 = arith.constant 0 : index
      %195 = vector.load %arg6[%c0_186, %c0_187, %c0_188] : memref<2x8x256xf32, #tpu.memory_space<vmem>>, vector<2x8x256xf32>
      tpu.vector_store %arg6[%c0_186, %c0_187, %c0_188], %194 {strides = array<i32>} : memref<2x8x256xf32, #tpu.memory_space<vmem>>, vector<2x8x256xf32>,
    } else {
    }
    return
  }
  func.func @transform_0(%arg0: i32) -> (i32, i32, i32, i32) {
    %c0_i32 = arith.constant 0 : i32
    %c0_i32_0 = arith.constant 0 : i32
    %c0_i32_1 = arith.constant 0 : i32
    %c0_i32_2 = arith.constant 0 : i32
    return %arg0, %c0_i32, %c0_i32_0, %c0_i32_1 : i32, i32, i32, i32
  }
  func.func @transform_1(%arg0: i32) -> (i32, i32, i32, i32) {
    %c0_i32 = arith.constant 0 : i32
    %c0_i32_0 = arith.constant 0 : i32
    %c0_i32_1 = arith.constant 0 : i32
    %c0_i32_2 = arith.constant 0 : i32
    return %arg0, %c0_i32, %c0_i32_0, %c0_i32_1 : i32, i32, i32, i32
  }
  func.func @transform_2(%arg0: i32) -> (i32, i32) {
    %c0_i32 = arith.constant 0 : i32
    %c0_i32_0 = arith.constant 0 : i32
    %c0_i32_1 = arith.constant 0 : i32
    return %c0_i32, %c0_i32_0 : i32, i32
  }
  func.func @transform_3(%arg0: i32) -> (i32, i32) {
    %c0_i32 = arith.constant 0 : i32
    %c0_i32_0 = arith.constant 0 : i32
    %c0_i32_1 = arith.constant 0 : i32
    return %c0_i32, %c0_i32_0 : i32, i32
  }
  func.func @transform_4(%arg0: i32) -> (i32, i32) {
    %c0_i32 = arith.constant 0 : i32
    %c0_i32_0 = arith.constant 0 : i32
    %c0_i32_1 = arith.constant 0 : i32
    return %c0_i32, %c0_i32_0 : i32, i32
  }
  func.func @transform_5(%arg0: i32) -> (i32, i32, i32) {
    %c0_i32 = arith.constant 0 : i32
    %c0_i32_0 = arith.constant 0 : i32
    %c0_i32_1 = arith.constant 0 : i32
    %c0_i32_2 = arith.constant 0 : i32
    return %c0_i32, %c0_i32_0, %c0_i32_1 : i32, i32, i32
  }
}

</mosaic_0001>

<llo_original>
// kernel: tpu_custom_call.1
$region0: #{tpu_custom_call.1}
  #allocation0 [shape = 'u32[]', space=smem, size = 0x4, offset = 0x4, fixed_abs, tag = 'smem constant byte address 0x4 - core index']
  #allocation1 [shape = 'u32[144,128]{1,0:T(1,128)}', space=vmem, size = 0x12000, scoped, tag = 'internal scratch']
  #allocation2 [shape = 'f32[4,8,16]{2,1,0:T(8,128)}', space=vmem, size = 0x4000, scoped, tag = 'scratch operand']
  #allocation3 [shape = 'f32[4,290]{1,0:T(4,128)}', space=vmem, size = 0x1800, scoped, tag = 'scratch operand']
  #allocation4 [shape = 'f32[72,256]{1,0:T(8,128)}', space=vmem, size = 0x12000, scoped, tag = 'scratch operand']
  #allocation5 [shape = 'f32[2,256]{1,0:T(2,128)}', space=vmem, size = 0x800, scoped, tag = 'scratch operand']
  #allocation6 [shape = 'f32[8,1]{1,0:T(8,128)}', space=vmem, size = 0x1000, scoped, tag = 'scratch operand']
  #allocation7 [shape = 'f32[8,1]{1,0:T(8,128)}', space=vmem, size = 0x1000, scoped, tag = 'scratch operand']
  %s0 = inlined_call_operand.hbm [shape: f32[2,4,8,8], index: 0, kind: input, shape index: {}]
  %s1 = inlined_call_operand.hbm [shape: f32[2,4,16,16], index: 1, kind: input, shape index: {}]
  %s2 = inlined_call_operand.vmem [shape: f32[8,72], index: 2, kind: input, shape index: {}]
  %s3 = inlined_call_operand.vmem [shape: f32[8,1], index: 3, kind: input, shape index: {}]
  %s4 = inlined_call_operand.vmem [shape: f32[8,1], index: 4, kind: input, shape index: {}]
  %s5 = inlined_call_operand.hbm [shape: f32[2,8,256], index: 5, kind: output, shape index: {}]
  %s6 = sld [smem:[#allocation0]]
  $region69: #{tpu_custom_call.1} parent=0
    _
  %s8 = ssub.s32 1, %s6
  %s9 = scalar_select 0, %s8, %s6
  $region1: #{tpu_custom_call.1} parent=0
    #allocation8 [shape = 'u8[32768]{0}', space=vmem, size = 0x8000, scoped, tag = 'input window, operand 0']
    #allocation9 [shape = 's32[2]{0}', space=sflag, size = 0x8, scoped, tag = 'scoped memory for tpu_custom_call.1']
    #allocation10 [shape = 's32[2]{0}', space=sflag, size = 0x8, scoped, tag = 'scoped memory for tpu_custom_call.1']
    #allocation11 [shape = 'u8[65536]{0}', space=vmem, size = 0x10000, scoped, tag = 'input window, operand 1']
    #allocation12 [shape = 's32[2]{0}', space=sflag, size = 0x8, scoped, tag = 'scoped memory for tpu_custom_call.1']
    #allocation13 [shape = 'u8[16384]{0}', space=vmem, size = 0x4000, scoped, tag = 'output window, operand 0, single buffered']
    %10 = vsyncpa [#allocation9], 0
    %s11 = scalar_lea.sflag [#allocation9], 1
    %12 = vsyncpa %s11, 0
    %13 = vsyncpa [#allocation12], 0
    %s14 = scalar_lea.sflag [#allocation12], 1
    %15 = vsyncpa %s14, 0
    %16 = vsyncpa [#allocation10], 0
    loop: start=0, step=1, limit=4
    $region2: #{tpu_custom_call.1} parent=1 // loop_pre_header
      _
    $region3: #{tpu_custom_call.1} parent=1 // loop_header
      %s18 = sphi 0, %s22
      %p19 = scmp.ge.s32.totalorder %s18, 4
      %s28 = sphi 0, %s30
      %s31 = sphi 0, %s28
      %s32 = sphi 0, %s31
      %s48 = sphi 0, %s32
      %s54 = sphi 0, %s56
      %s57 = sphi 0, %s54
      %s58 = sphi 0, %s57
      %s74 = sphi 0, %s58
      %s78 = sphi 0, %s78
      %s80 = sphi 0, %s78
      %s81 = sphi 0, %s80
      %s95 = sphi 0, %s81
      %s99 = sphi 0, %s99
      %s101 = sphi 0, %s99
      %s102 = sphi 0, %s101
      %s116 = sphi 0, %s102
      %s120 = sphi 0, %s120
      %s122 = sphi 0, %s120
      %s123 = sphi 0, %s122
      %s137 = sphi 0, %s123
      %s141 = sphi 0, %s141
      %s143 = sphi 0, %s141
      %s144 = sphi 0, %s143
      %s158 = sphi 0, %s144
    $region4: #{tpu_custom_call.1} parent=1 // loop_header_branch
      %21 = sbr.rel (%p19) target = $region8
    $region5: #{tpu_custom_call.1} parent=1 // loop_body
      %s23 = ssub.s32 %s18, 1
      %s24 = ssub.s32 %s18, 2
      %s25 = sadd.s32 %s18, 1
      %s26 = ssub.s32 %s18, %s25
      %p27 = scmp.eq.s32.totalorder %s26, 0
      %s29 = sadd.s32 %s28, 1
      %s30 = scalar_select %p27, %s28, %s29
      %p33 = pneg %p27
      %p34 = scmp.eq.s32.totalorder %s18, 1
      %p35 = por %p33, %p34
      %p36 = scmp.ne.s32.totalorder %s28, %s31
      %p37 = scmp.eq.s32.totalorder %s18, 0
      %p38 = por %p36, %p37
      %p39 = scmp.ne.s32.totalorder %s28, %s31
      %p40 = scmp.eq.s32.totalorder %s23, 1
      %p41 = por %p39, %p40
      %p42 = scmp.ne.s32.totalorder %s31, %s32
      %p43 = scmp.eq.s32.totalorder %s23, 0
      %p44 = por %p42, %p43
      %p45 = scmp.ne.s32.totalorder %s31, %s32
      %p46 = scmp.eq.s32.totalorder %s24, 1
      %p47 = por %p45, %p46
      %p49 = scmp.ne.s32.totalorder %s32, %s48
      %p50 = scmp.eq.s32.totalorder %s24, 0
      %p51 = por %p49, %p50
      %s52 = ssub.s32 %s18, %s25
      %p53 = scmp.eq.s32.totalorder %s52, 0
      %s55 = sadd.s32 %s54, 1
      %s56 = scalar_select %p53, %s54, %s55
      %p59 = pneg %p53
      %p60 = scmp.eq.s32.totalorder %s18, 1
      %p61 = por %p59, %p60
      %p62 = scmp.ne.s32.totalorder %s54, %s57
      %p63 = scmp.eq.s32.totalorder %s18, 0
      %p64 = por %p62, %p63
      %p65 = scmp.ne.s32.totalorder %s54, %s57
      %p66 = scmp.eq.s32.totalorder %s23, 1
      %p67 = por %p65, %p66
      %p68 = scmp.ne.s32.totalorder %s57, %s58
      %p69 = scmp.eq.s32.totalorder %s23, 0
      %p70 = por %p68, %p69
      %p71 = scmp.ne.s32.totalorder %s57, %s58
      %p72 = scmp.eq.s32.totalorder %s24, 1
      %p73 = por %p71, %p72
      %p75 = scmp.ne.s32.totalorder %s58, %s74
      %p76 = scmp.eq.s32.totalorder %s24, 0
      %p77 = por %p75, %p76
      %s79 = sadd.s32 %s78, 1
      %p82 = scmp.eq.s32.totalorder %s18, 1
      %p83 = scmp.ne.s32.totalorder %s78, %s80
      %p84 = scmp.eq.s32.totalorder %s18, 0
      %p85 = por %p83, %p84
      %p86 = scmp.ne.s32.totalorder %s78, %s80
      %p87 = scmp.eq.s32.totalorder %s23, 1
      %p88 = por %p86, %p87
      %p89 = scmp.ne.s32.totalorder %s80, %s81
      %p90 = scmp.eq.s32.totalorder %s23, 0
      %p91 = por %p89, %p90
      %p92 = scmp.ne.s32.totalorder %s80, %s81
      %p93 = scmp.eq.s32.totalorder %s24, 1
      %p94 = por %p92, %p93
      %p96 = scmp.ne.s32.totalorder %s81, %s95
      %p97 = scmp.eq.s32.totalorder %s24, 0
      %p98 = por %p96, %p97
      %s100 = sadd.s32 %s99, 1
      %p103 = scmp.eq.s32.totalorder %s18, 1
      %p104 = scmp.ne.s32.totalorder %s99, %s101
      %p105 = scmp.eq.s32.totalorder %s18, 0
      %p106 = por %p104, %p105
      %p107 = scmp.ne.s32.totalorder %s99, %s101
      %p108 = scmp.eq.s32.totalorder %s23, 1
      %p109 = por %p107, %p108
      %p110 = scmp.ne.s32.totalorder %s101, %s102
      %p111 = scmp.eq.s32.totalorder %s23, 0
      %p112 = por %p110, %p111
      %p113 = scmp.ne.s32.totalorder %s101, %s102
      %p114 = scmp.eq.s32.totalorder %s24, 1
      %p115 = por %p113, %p114
      %p117 = scmp.ne.s32.totalorder %s102, %s116
      %p118 = scmp.eq.s32.totalorder %s24, 0
      %p119 = por %p117, %p118
      %s121 = sadd.s32 %s120, 1
      %p124 = scmp.eq.s32.totalorder %s18, 1
      %p125 = scmp.ne.s32.totalorder %s120, %s122
      %p126 = scmp.eq.s32.totalorder %s18, 0
      %p127 = por %p125, %p126
      %p128 = scmp.ne.s32.totalorder %s120, %s122
      %p129 = scmp.eq.s32.totalorder %s23, 1
      %p130 = por %p128, %p129
      %p131 = scmp.ne.s32.totalorder %s122, %s123
      %p132 = scmp.eq.s32.totalorder %s23, 0
      %p133 = por %p131, %p132
      %p134 = scmp.ne.s32.totalorder %s122, %s123
      %p135 = scmp.eq.s32.totalorder %s24, 1
      %p136 = por %p134, %p135
      %p138 = scmp.ne.s32.totalorder %s123, %s137
      %p139 = scmp.eq.s32.totalorder %s24, 0
      %p140 = por %p138, %p139
      %s142 = sadd.s32 %s141, 1
      %p145 = scmp.eq.s32.totalorder %s18, 1
      %p146 = scmp.ne.s32.totalorder %s141, %s143
      %p147 = scmp.eq.s32.totalorder %s18, 0
      %p148 = por %p146, %p147
      %p149 = scmp.ne.s32.totalorder %s141, %s143
      %p150 = scmp.eq.s32.totalorder %s23, 1
      %p151 = por %p149, %p150
      %p152 = scmp.ne.s32.totalorder %s143, %s144
      %p153 = scmp.eq.s32.totalorder %s23, 0
      %p154 = por %p152, %p153
      %p155 = scmp.ne.s32.totalorder %s143, %s144
      %p156 = scmp.eq.s32.totalorder %s24, 1
      %p157 = por %p155, %p156
      %p159 = scmp.ne.s32.totalorder %s144, %s158
      %p160 = scmp.eq.s32.totalorder %s24, 0
      %p161 = por %p159, %p160
      %p162 = scmp.le.s32.totalorder 1, %s18
      %p163 = scmp.lt.s32.totalorder %s18, 3
      %p164 = pnand %p162, %p163
      %p165 = pneg %p164
      // Predicated region
      $region9: #{tpu_custom_call.1} parent=5 // pred_check
        _
      $region10: #{tpu_custom_call.1} parent=5 // pred_check_branch
        %167 = sbr.rel (%p164) target = $region12
      $region11: #{tpu_custom_call.1} parent=5 // pred_region
        %s168 = ssub.s32 %s18, 1
        // Predicated region
        $region13: #{tpu_custom_call.1} parent=11 // pred_check
          %p169 = pneg %p91
        $region14: #{tpu_custom_call.1} parent=11 // pred_check_branch
          %171 = sbr.rel (%p169) target = $region16
        $region15: #{tpu_custom_call.1} parent=11 // pred_region
          _
        $region16: #{tpu_custom_call.1} parent=11 // pred_fallthru
          _
        // Predicated region
        $region17: #{tpu_custom_call.1} parent=11 // pred_check
          %p172 = pneg %p112
        $region18: #{tpu_custom_call.1} parent=11 // pred_check_branch
          %174 = sbr.rel (%p172) target = $region20
        $region19: #{tpu_custom_call.1} parent=11 // pred_region
          _
        $region20: #{tpu_custom_call.1} parent=11 // pred_fallthru
          _
        // Predicated region
        $region21: #{tpu_custom_call.1} parent=11 // pred_check
          %p175 = pneg %p133
        $region22: #{tpu_custom_call.1} parent=11 // pred_check_branch
          %177 = sbr.rel (%p175) target = $region24
        $region23: #{tpu_custom_call.1} parent=11 // pred_region
          _
        $region24: #{tpu_custom_call.1} parent=11 // pred_fallthru
          _
      $region12: #{tpu_custom_call.1} parent=5 // pred_fallthru
        _
      %p178 = scmp.lt.s32.totalorder %s18, 2
      // Predicated region
      $region25: #{tpu_custom_call.1} parent=5 // pred_check
        %p179 = pneg %p178
      $region26: #{tpu_custom_call.1} parent=5 // pred_check_branch
        %181 = sbr.rel (%p179) target = $region28
      $region27: #{tpu_custom_call.1} parent=5 // pred_region
        // Predicated region
        $region29: #{tpu_custom_call.1} parent=27 // pred_check
          %p182 = pneg %p38
        $region30: #{tpu_custom_call.1} parent=27 // pred_check_branch
          %184 = sbr.rel (%p182) target = $region32
        $region31: #{tpu_custom_call.1} parent=27 // pred_region
          %s185 = sand.u32 %s28, 1
          %s186 = scalar_lea.sflag [#allocation9], %s185
          %s187 = sand.u32 %s28, 1
          %s188 = smul.addr %s187, 32
          %s189 = scalar_lea.vmem [#allocation8], %s188
          %s191 = ssub.s32 512, 512
          %192 = vsyncadd %s186, %s191
          %s193 = smul.addr %s18, 4
          %s194 = smul.addr %s193, 128
          %s195 = scalar_lea.hbm %s0, %s194
          %s196 = sshll.u32 %s189, 4
          %s197 = int_to_ptr.vmem [resolvable:$true] %s196
          %202 = dma.hbm_to_vmem [thread:$0]  %s195, 512, %s197, %s186, 128, 128, 8
        $region32: #{tpu_custom_call.1} parent=27 // pred_fallthru
          _
        // Predicated region
        $region33: #{tpu_custom_call.1} parent=27 // pred_check
          %p203 = pneg %p64
        $region34: #{tpu_custom_call.1} parent=27 // pred_check_branch
          %205 = sbr.rel (%p203) target = $region36
        $region35: #{tpu_custom_call.1} parent=27 // pred_region
          %s206 = sand.u32 %s54, 1
          %s207 = scalar_lea.sflag [#allocation12], %s206
          %s208 = sand.u32 %s54, 1
          %s209 = smul.addr %s208, 64
          %s210 = scalar_lea.vmem [#allocation11], %s209
          %s212 = ssub.s32 1024, 1024
          %213 = vsyncadd %s207, %s212
          %s214 = smul.addr %s18, 8
          %s215 = smul.addr %s214, 128
          %s216 = scalar_lea.hbm %s1, %s215
          %s217 = sshll.u32 %s210, 4
          %s218 = int_to_ptr.vmem [resolvable:$true] %s217
          %223 = dma.hbm_to_vmem [thread:$0]  %s216, 1024, %s218, %s207, 128, 128, 8
        $region36: #{tpu_custom_call.1} parent=27 // pred_fallthru
          _
      $region28: #{tpu_custom_call.1} parent=5 // pred_fallthru
        _
      %p224 = scmp.le.s32.totalorder 1, %s18
      %p225 = scmp.lt.s32.totalorder %s18, 3
      %p226 = pnand %p224, %p225
      %p227 = pneg %p226
      // Predicated region
      $region37: #{tpu_custom_call.1} parent=5 // pred_check
        _
      $region38: #{tpu_custom_call.1} parent=5 // pred_check_branch
        %229 = sbr.rel (%p226) target = $region40
      $region39: #{tpu_custom_call.1} parent=5 // pred_region
        %s230 = ssub.s32 %s18, 1
        %s231 = sand.u32 %s31, 1
        %s232 = scalar_lea.sflag [#allocation9], %s231
        %s233 = sand.u32 %s31, 1
        %s234 = smul.addr %s233, 32
        %s235 = scalar_lea.vmem [#allocation8], %s234
        // Predicated region
        $region41: #{tpu_custom_call.1} parent=39 // pred_check
          %p236 = pneg %p44
        $region42: #{tpu_custom_call.1} parent=39 // pred_check_branch
          %238 = sbr.rel (%p236) target = $region44
        $region43: #{tpu_custom_call.1} parent=39 // pred_region
          %239 = dma.done %s232, 512
        $region44: #{tpu_custom_call.1} parent=39 // pred_fallthru
          _
        %s240 = sand.u32 %s57, 1
        %s241 = scalar_lea.sflag [#allocation12], %s240
        %s242 = sand.u32 %s57, 1
        %s243 = smul.addr %s242, 64
        %s244 = scalar_lea.vmem [#allocation11], %s243
        // Predicated region
        $region45: #{tpu_custom_call.1} parent=39 // pred_check
          %p245 = pneg %p70
        $region46: #{tpu_custom_call.1} parent=39 // pred_check_branch
          %247 = sbr.rel (%p245) target = $region48
        $region47: #{tpu_custom_call.1} parent=39 // pred_region
          %248 = dma.done %s241, 1024
        $region48: #{tpu_custom_call.1} parent=39 // pred_fallthru
          _
        %s249 = sand.u32 %s31, 1
        %s250 = scalar_lea.sflag [#allocation9], %s249
        %s251 = sand.u32 %s31, 1
        %s252 = smul.addr %s251, 32
        %s253 = scalar_lea.vmem [#allocation8], %s252
        %p254 = pneg %p44
        %p255 = pneg %p41
        %s256 = sand.u32 %s57, 1
        %s257 = scalar_lea.sflag [#allocation12], %s256
        %s258 = sand.u32 %s57, 1
        %s259 = smul.addr %s258, 64
        %s260 = scalar_lea.vmem [#allocation11], %s259
        %p261 = pneg %p70
        %p262 = pneg %p67
        %p263 = pneg %p91
        %p264 = pneg %p88
        %p265 = pneg %p112
        %p266 = pneg %p109
        %p267 = pneg %p133
        %p268 = pneg %p130
        %p269 = pneg %p154
        %p270 = pneg %p151
        %p271 = scmp.eq.s32.totalorder %s23, 0
        // Predicated region
        $region49: #{tpu_custom_call.1} parent=39 // pred_check
          %p272 = pneg %p271
        $region50: #{tpu_custom_call.1} parent=39 // pred_check_branch
          %274 = sbr.rel (%p272) target = $region52
        $region51: #{tpu_custom_call.1} parent=39 // pred_region
          %275 = vst [vmem:[#allocation3] sm:$0xff] 0.0
          %vm276 = vcmask 273408
          %277 = vst.msk [vmem:[#allocation3 + $0x8] sm:$0xf] %vm276, 0.0
          %278 = vst [vmem:[#allocation4] sm:$0xff] 0.0
          %279 = vst [vmem:[#allocation4 + $0x8] sm:$0xff] 0.0
          %280 = vst [vmem:[#allocation4 + $0x10] sm:$0xff] 0.0
          %281 = vst [vmem:[#allocation4 + $0x18] sm:$0xff] 0.0
          %282 = vst [vmem:[#allocation4 + $0x20] sm:$0xff] 0.0
          %283 = vst [vmem:[#allocation4 + $0x28] sm:$0xff] 0.0
          %284 = vst [vmem:[#allocation4 + $0x30] sm:$0xff] 0.0
          %285 = vst [vmem:[#allocation4 + $0x38] sm:$0xff] 0.0
          %286 = vst [vmem:[#allocation4 + $0x40] sm:$0xff] 0.0
          %287 = vst [vmem:[#allocation4 + $0x48] sm:$0xff] 0.0
          %288 = vst [vmem:[#allocation4 + $0x50] sm:$0xff] 0.0
          %289 = vst [vmem:[#allocation4 + $0x58] sm:$0xff] 0.0
          %290 = vst [vmem:[#allocation4 + $0x60] sm:$0xff] 0.0
          %291 = vst [vmem:[#allocation4 + $0x68] sm:$0xff] 0.0
          %292 = vst [vmem:[#allocation4 + $0x70] sm:$0xff] 0.0
          %293 = vst [vmem:[#allocation4 + $0x78] sm:$0xff] 0.0
          %294 = vst [vmem:[#allocation4 + $0x80] sm:$0xff] 0.0
          %295 = vst [vmem:[#allocation4 + $0x88] sm:$0xff] 0.0
          %vm296 = vcmask 7168
          %297 = vst.msk [vmem:[#allocation6] sm:$0xff] %vm296, 0.0
          %298 = vst.msk [vmem:[#allocation7] sm:$0xff] %vm296, 0.0
          %v299 = vlaneseq
          %v300 = vand.u32 %v299, 127
          %vm301 = vcmp.ge.s32.totalorder %v300, 1
          %v302 = vsel %vm301, 1, 0
          %v303 = vcvt.s32.f32 %v302
          %vm304 = vcmp.le.s32.totalorder %v300, 14
          %v305 = vsel %vm304, 1, 0
          %v306 = vcvt.s32.f32 %v305
          %vm307 = vcmask 122880
          %308 = vst.msk [vmem:[#allocation5] sm:$0x1] %vm307, %v303
          %309 = vst.msk [vmem:[#allocation5 + $0x1] sm:$0x1] %vm307, %v306
          %v312 = vunpack.c.l.s4 1983009808
          %v313 = vunpack.c.0.s8 %v312
          %v314 = vlaneseq
          %v315 = vshrl.u32 %v314, 7
          %v316 = vsub.s32 %v313, %v315
          %v317 = vrot.slane %v303, %v316
          %318 = vrot.lane.b32.xlu0 %v317, 16
          %v319 = vpop.permute.xlu0 %318
          %vm321 = vcmask 254080
          %322 = vst.msk [vmem:[#allocation5] sm:$0x1] %vm321, %v319
          %v325 = vunpack.c.l.s4 1983009808
          %v326 = vunpack.c.0.s8 %v325
          %v327 = vlaneseq
          %v328 = vshrl.u32 %v327, 7
          %v329 = vsub.s32 %v326, %v328
          %v330 = vrot.slane %v306, %v329
          %331 = vrot.lane.b32.xlu0 %v330, 16
          %v332 = vpop.permute.xlu0 %331
          %334 = vst.msk [vmem:[#allocation5 + $0x1] sm:$0x1] %vm321, %v332
          %335 = vrot.lane.b32.xlu0 %v317, 32
          %v336 = vpop.permute.xlu0 %335
          %vm338 = vcmask 385280
          %339 = vst.msk [vmem:[#allocation5] sm:$0x1] %vm338, %v336
          %340 = vrot.lane.b32.xlu0 %v330, 32
          %v341 = vpop.permute.xlu0 %340
          %343 = vst.msk [vmem:[#allocation5 + $0x1] sm:$0x1] %vm338, %v341
          %344 = vrot.lane.b32.xlu0 %v317, 48
          %v345 = vpop.permute.xlu0 %344
          %vm347 = vcmask 516480
          %348 = vst.msk [vmem:[#allocation5] sm:$0x1] %vm347, %v345
          %349 = vrot.lane.b32.xlu0 %v330, 48
          %v350 = vpop.permute.xlu0 %349
          %352 = vst.msk [vmem:[#allocation5 + $0x1] sm:$0x1] %vm347, %v350
          %353 = vrot.lane.b32.xlu0 %v317, 64
          %v354 = vpop.permute.xlu0 %353
          %vm356 = vcmask 647680
          %357 = vst.msk [vmem:[#allocation5] sm:$0x1] %vm356, %v354
          %358 = vrot.lane.b32.xlu0 %v330, 64
          %v359 = vpop.permute.xlu0 %358
          %361 = vst.msk [vmem:[#allocation5 + $0x1] sm:$0x1] %vm356, %v359
          %362 = vrot.lane.b32.xlu0 %v317, 80
          %v363 = vpop.permute.xlu0 %362
          %vm365 = vcmask 778880
          %366 = vst.msk [vmem:[#allocation5] sm:$0x1] %vm365, %v363
          %367 = vrot.lane.b32.xlu0 %v330, 80
          %v368 = vpop.permute.xlu0 %367
          %370 = vst.msk [vmem:[#allocation5 + $0x1] sm:$0x1] %vm365, %v368
          %371 = vrot.lane.b32.xlu0 %v317, 96
          %v372 = vpop.permute.xlu0 %371
          %vm374 = vcmask 910080
          %375 = vst.msk [vmem:[#allocation5] sm:$0x1] %vm374, %v372
          %376 = vrot.lane.b32.xlu0 %v330, 96
          %v377 = vpop.permute.xlu0 %376
          %379 = vst.msk [vmem:[#allocation5 + $0x1] sm:$0x1] %vm374, %v377
          %380 = vrot.lane.b32.xlu0 %v317, 112
          %v381 = vpop.permute.xlu0 %380
          %vm383 = vcmask 1041280
          %384 = vst.msk [vmem:[#allocation5] sm:$0x1] %vm383, %v381
          %385 = vrot.lane.b32.xlu0 %v330, 112
          %v386 = vpop.permute.xlu0 %385
          %388 = vst.msk [vmem:[#allocation5 + $0x1] sm:$0x1] %vm383, %v386
          %389 = vst.msk [vmem:[#allocation5 + $0x2] sm:$0x1] %vm307, %v303
          %390 = vst.msk [vmem:[#allocation5 + $0x3] sm:$0x1] %vm307, %v306
          %391 = vst.msk [vmem:[#allocation5 + $0x2] sm:$0x1] %vm321, %v319
          %392 = vst.msk [vmem:[#allocation5 + $0x3] sm:$0x1] %vm321, %v332
          %393 = vst.msk [vmem:[#allocation5 + $0x2] sm:$0x1] %vm338, %v336
          %394 = vst.msk [vmem:[#allocation5 + $0x3] sm:$0x1] %vm338, %v341
          %395 = vst.msk [vmem:[#allocation5 + $0x2] sm:$0x1] %vm347, %v345
          %396 = vst.msk [vmem:[#allocation5 + $0x3] sm:$0x1] %vm347, %v350
          %397 = vst.msk [vmem:[#allocation5 + $0x2] sm:$0x1] %vm356, %v354
          %398 = vst.msk [vmem:[#allocation5 + $0x3] sm:$0x1] %vm356, %v359
          %399 = vst.msk [vmem:[#allocation5 + $0x2] sm:$0x1] %vm365, %v363
          %400 = vst.msk [vmem:[#allocation5 + $0x3] sm:$0x1] %vm365, %v368
          %401 = vst.msk [vmem:[#allocation5 + $0x2] sm:$0x1] %vm374, %v372
          %402 = vst.msk [vmem:[#allocation5 + $0x3] sm:$0x1] %vm374, %v377
          %403 = vst.msk [vmem:[#allocation5 + $0x2] sm:$0x1] %vm383, %v381
          %404 = vst.msk [vmem:[#allocation5 + $0x3] sm:$0x1] %vm383, %v386
        $region52: #{tpu_custom_call.1} parent=39 // pred_fallthru
          _
        %v405 = vlaneseq
        %v406 = vshrl.u32 %v405, 7
        %v407 = vlaneseq
        %v408 = vand.u32 %v407, 127
        %v409 = vmul.u32 %v406, 2
        %v410 = vsub.s32 %v408, %v409
        %vm411 = vcmp.ge.s32.totalorder %v410, 0
        %vm412 = vcmp.le.s32.totalorder %v410, 1
        %vm413 = vmand %vm411, %vm412
        %v414 = vsel %vm413, 1, 0
        %v415 = vcvt.s32.f32 %v414
        %v416 = vld [vmem:[%s235] sm:$0xff]
        %v417 = vld [vmem:[%s235 + $0x8] sm:$0xff]
        %v418 = vld [vmem:[%s235 + $0x10] sm:$0xff]
        %v419 = vld [vmem:[%s235 + $0x18] sm:$0xff]
        %vm420 = vcmask 64512
        %v422 = vsel %vm420, %v416, 0
        %v425 = vsel %vm420, %v417, 0
        %v428 = vsel %vm420, %v418, 0
        %v431 = vsel %vm420, %v419, 0
        %433 = vmatprep.subr.mxu0 0.0
        %434 = vmatpush1.msra.mxu0 0.0
        %435 = vmatprep.subr.mxu0 0.0
        %436 = vmatpush1.msra.mxu0 0.0
        %437 = vmatprep.subr.mxu0 0.0
        %438 = vmatpush1.msra.mxu0 0.0
        %439 = vmatprep.subr.mxu0 0.0
        %440 = vmatpush1.msra.mxu0 0.0
        %441 = vmatprep.subr.mxu0 0.0
        %442 = vmatpush1.msra.mxu0 0.0
        %443 = vmatprep.subr.mxu0 0.0
        %444 = vmatpush1.msra.mxu0 0.0
        %445 = vmatprep.subr.mxu0 0.0
        %446 = vmatpush1.msra.mxu0 0.0
        %447 = vmatprep.subr.mxu0 0.0
        %448 = vmatpush1.msra.mxu0 0.0
        %449 = vmatprep.subr.mxu0 0.0
        %450 = vmatpush1.msra.mxu0 0.0
        %451 = vmatprep.subr.mxu0 0.0
        %452 = vmatpush1.msra.mxu0 0.0
        %453 = vmatprep.subr.mxu0 0.0
        %454 = vmatpush1.msra.mxu0 0.0
        %455 = vmatprep.subr.mxu0 0.0
        %456 = vmatpush1.msra.mxu0 0.0
        %457 = vmatprep.subr.mxu0 0.0
        %458 = vmatpush1.msra.mxu0 0.0
        %459 = vmatprep.subr.mxu0 0.0
        %460 = vmatpush1.msra.mxu0 0.0
        %461 = vmatprep.subr.mxu0 0.0
        %462 = vmatpush1.msra.mxu0 0.0
        %463 = vmatprep.subr.mxu0 0.0
        %464 = vmatpush1.msra.mxu0 %v415
        %465 = vmatprep.subr.mxu0 0.0
        %466 = vmatpush2.msra.mxu0 0.0
        %467 = vmatprep.subr.mxu0 0.0
        %468 = vmatpush2.msra.mxu0 0.0
        %469 = vmatprep.subr.mxu0 0.0
        %470 = vmatpush2.msra.mxu0 0.0
        %471 = vmatprep.subr.mxu0 0.0
        %472 = vmatpush2.msra.mxu0 0.0
        %473 = vmatprep.subr.mxu0 0.0
        %474 = vmatpush2.msra.mxu0 0.0
        %475 = vmatprep.subr.mxu0 0.0
        %476 = vmatpush2.msra.mxu0 0.0
        %477 = vmatprep.subr.mxu0 0.0
        %478 = vmatpush2.msra.mxu0 0.0
        %479 = vmatprep.subr.mxu0 0.0
        %480 = vmatpush2.msra.mxu0 0.0
        %481 = vmatprep.subr.mxu0 0.0
        %482 = vmatpush2.msra.mxu0 0.0
        %483 = vmatprep.subr.mxu0 0.0
        %484 = vmatpush2.msra.mxu0 0.0
        %485 = vmatprep.subr.mxu0 0.0
        %486 = vmatpush2.msra.mxu0 0.0
        %487 = vmatprep.subr.mxu0 0.0
        %488 = vmatpush2.msra.mxu0 0.0
        %489 = vmatprep.subr.mxu0 0.0
        %490 = vmatpush2.msra.mxu0 0.0
        %491 = vmatprep.subr.mxu0 0.0
        %492 = vmatpush2.msra.mxu0 0.0
        %493 = vmatprep.subr.mxu0 0.0
        %494 = vmatpush2.msra.mxu0 0.0
        %495 = vmatprep.subr.mxu0 0.0
        %496 = vmatpush2.msra.mxu0 0.0
        %497 = vmatprep.mubr.f32.mxu0 0.0
        %498 = vmatmul.mubr.f32.gmra.mxu0 %v422
        %v499 = vpop.f32.mrf.mxu0
        %v500 = vadd.f32 0.0, %v499
        %v501 = vpop.f32.mrf.mxu0
        %502 = vmatprep.mubr.f32.mxu0 0.0
        %503 = vmatmul.mubr.f32.gmra.mxu0 %v425
        %v504 = vpop.f32.mrf.mxu0
        %v505 = vadd.f32 0.0, %v504
        %v506 = vpop.f32.mrf.mxu0
        %507 = vmatprep.mubr.f32.mxu0 0.0
        %508 = vmatmul.mubr.f32.gmra.mxu0 %v428
        %v509 = vpop.f32.mrf.mxu0
        %v510 = vadd.f32 0.0, %v509
        %v511 = vpop.f32.mrf.mxu0
        %512 = vmatprep.mubr.f32.mxu0 0.0
        %513 = vmatmul.mubr.f32.gmra.mxu0 %v431
        %v514 = vpop.f32.mrf.mxu0
        %v515 = vadd.f32 0.0, %v514
        %v516 = vpop.f32.mrf.mxu0
        %517 = vdwg.mxu0
        %vm518 = vcmask 130048
        %519 = vst.msk [vmem:[#allocation2] sm:$0xff] %vm518, %v500
        %520 = vst.msk [vmem:[#allocation2 + $0x8] sm:$0xff] %vm518, %v505
        %521 = vst.msk [vmem:[#allocation2 + $0x10] sm:$0xff] %vm518, %v510
        %522 = vst.msk [vmem:[#allocation2 + $0x18] sm:$0xff] %vm518, %v515
        %v523 = vld [vmem:[#allocation2] sm:$0x1]
        %v524 = vld [vmem:[#allocation2 + $0x8] sm:$0x1]
        %v525 = vld [vmem:[#allocation2 + $0x10] sm:$0x1]
        %v526 = vld [vmem:[#allocation2 + $0x18] sm:$0x1]
        %v527 = vld [vmem:[%s244] sm:$0x1]
        %v528 = vld [vmem:[%s244 + $0x10] sm:$0x1]
        %v529 = vld [vmem:[%s244 + $0x20] sm:$0x1]
        %v530 = vld [vmem:[%s244 + $0x30] sm:$0x1]
        %v531 = vadd.f32 %v523, %v527
        %v532 = vadd.f32 %v524, %v528
        %v533 = vadd.f32 %v525, %v529
        %v534 = vadd.f32 %v526, %v530
        %v539 = vrot.slane %v532, 7
        %vm540 = vcmask 1041409
        %v541 = vsel %vm540, %v539, %v531
        %vm542 = vcmask 1045509
        %v543 = vsel %vm542, %v539, %v541
        %v544 = vrot.slane %v533, 6
        %vm545 = vcmask 1042434
        %v546 = vsel %vm545, %v544, %v543
        %vm547 = vcmask 1046534
        %v548 = vsel %vm547, %v544, %v546
        %v549 = vrot.slane %v534, 5
        %vm550 = vcmask 1043459
        %v551 = vsel %vm550, %v549, %v548
        %vm552 = vcmask 1047559
        %v553 = vsel %vm552, %v549, %v551
        %554 = vrot.lane.b32.xlu0 %v553, 17
        %v555 = vpop.permute.xlu0 %554
        %vm557 = vcmask 265352
        %558 = vst.msk [vmem:[#allocation3] sm:$0xf] %vm557, %v555
        %v559 = vld [vmem:[#allocation2] sm:$0x1]
        %v560 = vld [vmem:[#allocation2 + $0x8] sm:$0x1]
        %v561 = vld [vmem:[#allocation2 + $0x10] sm:$0x1]
        %v562 = vld [vmem:[#allocation2 + $0x18] sm:$0x1]
        %v563 = vld [vmem:[%s244 + $0x1] sm:$0x1]
        %v564 = vld [vmem:[%s244 + $0x11] sm:$0x1]
        %v565 = vld [vmem:[%s244 + $0x21] sm:$0x1]
        %v566 = vld [vmem:[%s244 + $0x31] sm:$0x1]
        %v567 = vadd.f32 %v559, %v563
        %v568 = vadd.f32 %v560, %v564
        %v569 = vadd.f32 %v561, %v565
        %v570 = vadd.f32 %v562, %v566
        %v575 = vrot.slane %v568, 7
        %v576 = vsel %vm540, %v575, %v567
        %v577 = vsel %vm542, %v575, %v576
        %v578 = vrot.slane %v569, 6
        %v579 = vsel %vm545, %v578, %v577
        %v580 = vsel %vm547, %v578, %v579
        %v581 = vrot.slane %v570, 5
        %v582 = vsel %vm550, %v581, %v580
        %v583 = vsel %vm552, %v581, %v582
        %584 = vrot.lane.b32.xlu0 %v583, 33
        %v585 = vpop.permute.xlu0 %584
        %vm587 = vcmask 396552
        %588 = vst.msk [vmem:[#allocation3] sm:$0xf] %vm587, %v585
        %v589 = vld [vmem:[#allocation2 + $0x1] sm:$0x1]
        %v590 = vld [vmem:[#allocation2 + $0x9] sm:$0x1]
        %v591 = vld [vmem:[#allocation2 + $0x11] sm:$0x1]
        %v592 = vld [vmem:[#allocation2 + $0x19] sm:$0x1]
        %v593 = vld [vmem:[%s244 + $0x2] sm:$0x1]
        %v594 = vld [vmem:[%s244 + $0x12] sm:$0x1]
        %v595 = vld [vmem:[%s244 + $0x22] sm:$0x1]
        %v596 = vld [vmem:[%s244 + $0x32] sm:$0x1]
        %v597 = vadd.f32 %v589, %v593
        %v598 = vadd.f32 %v590, %v594
        %v599 = vadd.f32 %v591, %v595
        %v600 = vadd.f32 %v592, %v596
        %v605 = vrot.slane %v598, 7
        %v606 = vsel %vm540, %v605, %v597
        %v607 = vsel %vm542, %v605, %v606
        %v608 = vrot.slane %v599, 6
        %v609 = vsel %vm545, %v608, %v607
        %v610 = vsel %vm547, %v608, %v609
        %v611 = vrot.slane %v600, 5
        %v612 = vsel %vm550, %v611, %v610
        %v613 = vsel %vm552, %v611, %v612
        %614 = vrot.lane.b32.xlu0 %v613, 49
        %v615 = vpop.permute.xlu0 %614
        %vm617 = vcmask 527752
        %618 = vst.msk [vmem:[#allocation3] sm:$0xf] %vm617, %v615
        %v619 = vld [vmem:[#allocation2 + $0x1] sm:$0x1]
        %v620 = vld [vmem:[#allocation2 + $0x9] sm:$0x1]
        %v621 = vld [vmem:[#allocation2 + $0x11] sm:$0x1]
        %v622 = vld [vmem:[#allocation2 + $0x19] sm:$0x1]
        %v623 = vld [vmem:[%s244 + $0x3] sm:$0x1]
        %v624 = vld [vmem:[%s244 + $0x13] sm:$0x1]
        %v625 = vld [vmem:[%s244 + $0x23] sm:$0x1]
        %v626 = vld [vmem:[%s244 + $0x33] sm:$0x1]
        %v627 = vadd.f32 %v619, %v623
        %v628 = vadd.f32 %v620, %v624
        %v629 = vadd.f32 %v621, %v625
        %v630 = vadd.f32 %v622, %v626
        %v635 = vrot.slane %v628, 7
        %v636 = vsel %vm540, %v635, %v627
        %v637 = vsel %vm542, %v635, %v636
        %v638 = vrot.slane %v629, 6
        %v639 = vsel %vm545, %v638, %v637
        %v640 = vsel %vm547, %v638, %v639
        %v641 = vrot.slane %v630, 5
        %v642 = vsel %vm550, %v641, %v640
        %v643 = vsel %vm552, %v641, %v642
        %644 = vrot.lane.b32.xlu0 %v643, 65
        %v645 = vpop.permute.xlu0 %644
        %vm647 = vcmask 658952
        %648 = vst.msk [vmem:[#allocation3] sm:$0xf] %vm647, %v645
        %v649 = vld [vmem:[#allocation2 + $0x2] sm:$0x1]
        %v650 = vld [vmem:[#allocation2 + $0xa] sm:$0x1]
        %v651 = vld [vmem:[#allocation2 + $0x12] sm:$0x1]
        %v652 = vld [vmem:[#allocation2 + $0x1a] sm:$0x1]
        %v653 = vld [vmem:[%s244 + $0x4] sm:$0x1]
        %v654 = vld [vmem:[%s244 + $0x14] sm:$0x1]
        %v655 = vld [vmem:[%s244 + $0x24] sm:$0x1]
        %v656 = vld [vmem:[%s244 + $0x34] sm:$0x1]
        %v657 = vadd.f32 %v649, %v653
        %v658 = vadd.f32 %v650, %v654
        %v659 = vadd.f32 %v651, %v655
        %v660 = vadd.f32 %v652, %v656
        %v665 = vrot.slane %v658, 7
        %v666 = vsel %vm540, %v665, %v657
        %v667 = vsel %vm542, %v665, %v666
        %v668 = vrot.slane %v659, 6
        %v669 = vsel %vm545, %v668, %v667
        %v670 = vsel %vm547, %v668, %v669
        %v671 = vrot.slane %v660, 5
        %v672 = vsel %vm550, %v671, %v670
        %v673 = vsel %vm552, %v671, %v672
        %674 = vrot.lane.b32.xlu0 %v673, 81
        %v675 = vpop.permute.xlu0 %674
        %vm677 = vcmask 790152
        %678 = vst.msk [vmem:[#allocation3] sm:$0xf] %vm677, %v675
        %v679 = vld [vmem:[#allocation2 + $0x2] sm:$0x1]
        %v680 = vld [vmem:[#allocation2 + $0xa] sm:$0x1]
        %v681 = vld [vmem:[#allocation2 + $0x12] sm:$0x1]
        %v682 = vld [vmem:[#allocation2 + $0x1a] sm:$0x1]
        %v683 = vld [vmem:[%s244 + $0x5] sm:$0x1]
        %v684 = vld [vmem:[%s244 + $0x15] sm:$0x1]
        %v685 = vld [vmem:[%s244 + $0x25] sm:$0x1]
        %v686 = vld [vmem:[%s244 + $0x35] sm:$0x1]
        %v687 = vadd.f32 %v679, %v683
        %v688 = vadd.f32 %v680, %v684
        %v689 = vadd.f32 %v681, %v685
        %v690 = vadd.f32 %v682, %v686
        %v695 = vrot.slane %v688, 7
        %v696 = vsel %vm540, %v695, %v687
        %v697 = vsel %vm542, %v695, %v696
        %v698 = vrot.slane %v689, 6
        %v699 = vsel %vm545, %v698, %v697
        %v700 = vsel %vm547, %v698, %v699
        %v701 = vrot.slane %v690, 5
        %v702 = vsel %vm550, %v701, %v700
        %v703 = vsel %vm552, %v701, %v702
        %704 = vrot.lane.b32.xlu0 %v703, 97
        %v705 = vpop.permute.xlu0 %704
        %vm707 = vcmask 921352
        %708 = vst.msk [vmem:[#allocation3] sm:$0xf] %vm707, %v705
        %v709 = vld [vmem:[#allocation2 + $0x3] sm:$0x1]
        %v710 = vld [vmem:[#allocation2 + $0xb] sm:$0x1]
        %v711 = vld [vmem:[#allocation2 + $0x13] sm:$0x1]
        %v712 = vld [vmem:[#allocation2 + $0x1b] sm:$0x1]
        %v713 = vld [vmem:[%s244 + $0x6] sm:$0x1]
        %v714 = vld [vmem:[%s244 + $0x16] sm:$0x1]
        %v715 = vld [vmem:[%s244 + $0x26] sm:$0x1]
        %v716 = vld [vmem:[%s244 + $0x36] sm:$0x1]
        %v717 = vadd.f32 %v709, %v713
        %v718 = vadd.f32 %v710, %v714
        %v719 = vadd.f32 %v711, %v715
        %v720 = vadd.f32 %v712, %v716
        %v725 = vrot.slane %v718, 7
        %v726 = vsel %vm540, %v725, %v717
        %v727 = vsel %vm542, %v725, %v726
        %v728 = vrot.slane %v719, 6
        %v729 = vsel %vm545, %v728, %v727
        %v730 = vsel %vm547, %v728, %v729
        %v731 = vrot.slane %v720, 5
        %v732 = vsel %vm550, %v731, %v730
        %v733 = vsel %vm552, %v731, %v732
        %734 = vrot.lane.b32.xlu0 %v733, 113
        %v735 = vpop.permute.xlu0 %734
        %v736 = vrot.slane %v735, 4
        %vm737 = vcmask 924672
        %v738 = vsel %vm737, %v736, %v735
        %vm740 = vcmask 1044360
        %vm741 = vcmask 7172
        %vm742 = vmor %vm741, %vm740
        %743 = vst.msk [vmem:[#allocation3] sm:$0xff] %vm742, %v738
        %v744 = vld [vmem:[#allocation2 + $0x3] sm:$0x1]
        %v745 = vld [vmem:[#allocation2 + $0xb] sm:$0x1]
        %v746 = vld [vmem:[#allocation2 + $0x13] sm:$0x1]
        %v747 = vld [vmem:[#allocation2 + $0x1b] sm:$0x1]
        %v748 = vld [vmem:[%s244 + $0x7] sm:$0x1]
        %v749 = vld [vmem:[%s244 + $0x17] sm:$0x1]
        %v750 = vld [vmem:[%s244 + $0x27] sm:$0x1]
        %v751 = vld [vmem:[%s244 + $0x37] sm:$0x1]
        %v752 = vadd.f32 %v744, %v748
        %v753 = vadd.f32 %v745, %v749
        %v754 = vadd.f32 %v746, %v750
        %v755 = vadd.f32 %v747, %v751
        %v760 = vrot.slane %v753, 7
        %v761 = vsel %vm540, %v760, %v752
        %v762 = vsel %vm542, %v760, %v761
        %v763 = vrot.slane %v754, 6
        %v764 = vsel %vm545, %v763, %v762
        %v765 = vsel %vm547, %v763, %v764
        %v766 = vrot.slane %v755, 5
        %v767 = vsel %vm550, %v766, %v765
        %v768 = vsel %vm552, %v766, %v767
        %769 = vrot.lane.b32.xlu0 %v768, 1
        %v770 = vpop.permute.xlu0 %769
        %vm772 = vcmask 134152
        %773 = vst.msk [vmem:[#allocation3 + $0x4] sm:$0xf] %vm772, %v770
        %v774 = vld [vmem:[#allocation2 + $0x4] sm:$0x1]
        %v775 = vld [vmem:[#allocation2 + $0xc] sm:$0x1]
        %v776 = vld [vmem:[#allocation2 + $0x14] sm:$0x1]
        %v777 = vld [vmem:[#allocation2 + $0x1c] sm:$0x1]
        %v778 = vld [vmem:[%s244 + $0x8] sm:$0x1]
        %v779 = vld [vmem:[%s244 + $0x18] sm:$0x1]
        %v780 = vld [vmem:[%s244 + $0x28] sm:$0x1]
        %v781 = vld [vmem:[%s244 + $0x38] sm:$0x1]
        %v782 = vadd.f32 %v774, %v778
        %v783 = vadd.f32 %v775, %v779
        %v784 = vadd.f32 %v776, %v780
        %v785 = vadd.f32 %v777, %v781
        %v790 = vrot.slane %v783, 7
        %v791 = vsel %vm540, %v790, %v782
        %v792 = vsel %vm542, %v790, %v791
        %v793 = vrot.slane %v784, 6
        %v794 = vsel %vm545, %v793, %v792
        %v795 = vsel %vm547, %v793, %v794
        %v796 = vrot.slane %v785, 5
        %v797 = vsel %vm550, %v796, %v795
        %v798 = vsel %vm552, %v796, %v797
        %799 = vrot.lane.b32.xlu0 %v798, 17
        %v800 = vpop.permute.xlu0 %799
        %802 = vst.msk [vmem:[#allocation3 + $0x4] sm:$0xf] %vm557, %v800
        %v803 = vld [vmem:[#allocation2 + $0x4] sm:$0x1]
        %v804 = vld [vmem:[#allocation2 + $0xc] sm:$0x1]
        %v805 = vld [vmem:[#allocation2 + $0x14] sm:$0x1]
        %v806 = vld [vmem:[#allocation2 + $0x1c] sm:$0x1]
        %v807 = vld [vmem:[%s244 + $0x9] sm:$0x1]
        %v808 = vld [vmem:[%s244 + $0x19] sm:$0x1]
        %v809 = vld [vmem:[%s244 + $0x29] sm:$0x1]
        %v810 = vld [vmem:[%s244 + $0x39] sm:$0x1]
        %v811 = vadd.f32 %v803, %v807
        %v812 = vadd.f32 %v804, %v808
        %v813 = vadd.f32 %v805, %v809
        %v814 = vadd.f32 %v806, %v810
        %v819 = vrot.slane %v812, 7
        %v820 = vsel %vm540, %v819, %v811
        %v821 = vsel %vm542, %v819, %v820
        %v822 = vrot.slane %v813, 6
        %v823 = vsel %vm545, %v822, %v821
        %v824 = vsel %vm547, %v822, %v823
        %v825 = vrot.slane %v814, 5
        %v826 = vsel %vm550, %v825, %v824
        %v827 = vsel %vm552, %v825, %v826
        %828 = vrot.lane.b32.xlu0 %v827, 33
        %v829 = vpop.permute.xlu0 %828
        %831 = vst.msk [vmem:[#allocation3 + $0x4] sm:$0xf] %vm587, %v829
        %v832 = vld [vmem:[#allocation2 + $0x5] sm:$0x1]
        %v833 = vld [vmem:[#allocation2 + $0xd] sm:$0x1]
        %v834 = vld [vmem:[#allocation2 + $0x15] sm:$0x1]
        %v835 = vld [vmem:[#allocation2 + $0x1d] sm:$0x1]
        %v836 = vld [vmem:[%s244 + $0xa] sm:$0x1]
        %v837 = vld [vmem:[%s244 + $0x1a] sm:$0x1]
        %v838 = vld [vmem:[%s244 + $0x2a] sm:$0x1]
        %v839 = vld [vmem:[%s244 + $0x3a] sm:$0x1]
        %v840 = vadd.f32 %v832, %v836
        %v841 = vadd.f32 %v833, %v837
        %v842 = vadd.f32 %v834, %v838
        %v843 = vadd.f32 %v835, %v839
        %v848 = vrot.slane %v841, 7
        %v849 = vsel %vm540, %v848, %v840
        %v850 = vsel %vm542, %v848, %v849
        %v851 = vrot.slane %v842, 6
        %v852 = vsel %vm545, %v851, %v850
        %v853 = vsel %vm547, %v851, %v852
        %v854 = vrot.slane %v843, 5
        %v855 = vsel %vm550, %v854, %v853
        %v856 = vsel %vm552, %v854, %v855
        %857 = vrot.lane.b32.xlu0 %v856, 49
        %v858 = vpop.permute.xlu0 %857
        %860 = vst.msk [vmem:[#allocation3 + $0x4] sm:$0xf] %vm617, %v858
        %v861 = vld [vmem:[#allocation2 + $0x5] sm:$0x1]
        %v862 = vld [vmem:[#allocation2 + $0xd] sm:$0x1]
        %v863 = vld [vmem:[#allocation2 + $0x15] sm:$0x1]
        %v864 = vld [vmem:[#allocation2 + $0x1d] sm:$0x1]
        %v865 = vld [vmem:[%s244 + $0xb] sm:$0x1]
        %v866 = vld [vmem:[%s244 + $0x1b] sm:$0x1]
        %v867 = vld [vmem:[%s244 + $0x2b] sm:$0x1]
        %v868 = vld [vmem:[%s244 + $0x3b] sm:$0x1]
        %v869 = vadd.f32 %v861, %v865
        %v870 = vadd.f32 %v862, %v866
        %v871 = vadd.f32 %v863, %v867
        %v872 = vadd.f32 %v864, %v868
        %v877 = vrot.slane %v870, 7
        %v878 = vsel %vm540, %v877, %v869
        %v879 = vsel %vm542, %v877, %v878
        %v880 = vrot.slane %v871, 6
        %v881 = vsel %vm545, %v880, %v879
        %v882 = vsel %vm547, %v880, %v881
        %v883 = vrot.slane %v872, 5
        %v884 = vsel %vm550, %v883, %v882
        %v885 = vsel %vm552, %v883, %v884
        %886 = vrot.lane.b32.xlu0 %v885, 65
        %v887 = vpop.permute.xlu0 %886
        %889 = vst.msk [vmem:[#allocation3 + $0x4] sm:$0xf] %vm647, %v887
        %v890 = vld [vmem:[#allocation2 + $0x6] sm:$0x1]
        %v891 = vld [vmem:[#allocation2 + $0xe] sm:$0x1]
        %v892 = vld [vmem:[#allocation2 + $0x16] sm:$0x1]
        %v893 = vld [vmem:[#allocation2 + $0x1e] sm:$0x1]
        %v894 = vld [vmem:[%s244 + $0xc] sm:$0x1]
        %v895 = vld [vmem:[%s244 + $0x1c] sm:$0x1]
        %v896 = vld [vmem:[%s244 + $0x2c] sm:$0x1]
        %v897 = vld [vmem:[%s244 + $0x3c] sm:$0x1]
        %v898 = vadd.f32 %v890, %v894
        %v899 = vadd.f32 %v891, %v895
        %v900 = vadd.f32 %v892, %v896
        %v901 = vadd.f32 %v893, %v897
        %v906 = vrot.slane %v899, 7
        %v907 = vsel %vm540, %v906, %v898
        %v908 = vsel %vm542, %v906, %v907
        %v909 = vrot.slane %v900, 6
        %v910 = vsel %vm545, %v909, %v908
        %v911 = vsel %vm547, %v909, %v910
        %v912 = vrot.slane %v901, 5
        %v913 = vsel %vm550, %v912, %v911
        %v914 = vsel %vm552, %v912, %v913
        %915 = vrot.lane.b32.xlu0 %v914, 81
        %v916 = vpop.permute.xlu0 %915
        %918 = vst.msk [vmem:[#allocation3 + $0x4] sm:$0xf] %vm677, %v916
        %v919 = vld [vmem:[#allocation2 + $0x6] sm:$0x1]
        %v920 = vld [vmem:[#allocation2 + $0xe] sm:$0x1]
        %v921 = vld [vmem:[#allocation2 + $0x16] sm:$0x1]
        %v922 = vld [vmem:[#allocation2 + $0x1e] sm:$0x1]
        %v923 = vld [vmem:[%s244 + $0xd] sm:$0x1]
        %v924 = vld [vmem:[%s244 + $0x1d] sm:$0x1]
        %v925 = vld [vmem:[%s244 + $0x2d] sm:$0x1]
        %v926 = vld [vmem:[%s244 + $0x3d] sm:$0x1]
        %v927 = vadd.f32 %v919, %v923
        %v928 = vadd.f32 %v920, %v924
        %v929 = vadd.f32 %v921, %v925
        %v930 = vadd.f32 %v922, %v926
        %v935 = vrot.slane %v928, 7
        %v936 = vsel %vm540, %v935, %v927
        %v937 = vsel %vm542, %v935, %v936
        %v938 = vrot.slane %v929, 6
        %v939 = vsel %vm545, %v938, %v937
        %v940 = vsel %vm547, %v938, %v939
        %v941 = vrot.slane %v930, 5
        %v942 = vsel %vm550, %v941, %v940
        %v943 = vsel %vm552, %v941, %v942
        %944 = vrot.lane.b32.xlu0 %v943, 97
        %v945 = vpop.permute.xlu0 %944
        %947 = vst.msk [vmem:[#allocation3 + $0x4] sm:$0xf] %vm707, %v945
        %v948 = vld [vmem:[#allocation2 + $0x7] sm:$0x1]
        %v949 = vld [vmem:[#allocation2 + $0xf] sm:$0x1]
        %v950 = vld [vmem:[#allocation2 + $0x17] sm:$0x1]
        %v951 = vld [vmem:[#allocation2 + $0x1f] sm:$0x1]
        %v952 = vld [vmem:[%s244 + $0xe] sm:$0x1]
        %v953 = vld [vmem:[%s244 + $0x1e] sm:$0x1]
        %v954 = vld [vmem:[%s244 + $0x2e] sm:$0x1]
        %v955 = vld [vmem:[%s244 + $0x3e] sm:$0x1]
        %v956 = vadd.f32 %v948, %v952
        %v957 = vadd.f32 %v949, %v953
        %v958 = vadd.f32 %v950, %v954
        %v959 = vadd.f32 %v951, %v955
        %v964 = vrot.slane %v957, 7
        %v965 = vsel %vm540, %v964, %v956
        %v966 = vsel %vm542, %v964, %v965
        %v967 = vrot.slane %v958, 6
        %v968 = vsel %vm545, %v967, %v966
        %v969 = vsel %vm547, %v967, %v968
        %v970 = vrot.slane %v959, 5
        %v971 = vsel %vm550, %v970, %v969
        %v972 = vsel %vm552, %v970, %v971
        %973 = vrot.lane.b32.xlu0 %v972, 113
        %v974 = vpop.permute.xlu0 %973
        %v975 = vrot.slane %v974, 4
        %v976 = vsel %vm737, %v975, %v974
        %978 = vst.msk [vmem:[#allocation3 + $0x4] sm:$0xff] %vm742, %v976
        %v979 = vld [vmem:[#allocation2 + $0x7] sm:$0x1]
        %v980 = vld [vmem:[#allocation2 + $0xf] sm:$0x1]
        %v981 = vld [vmem:[#allocation2 + $0x17] sm:$0x1]
        %v982 = vld [vmem:[#allocation2 + $0x1f] sm:$0x1]
        %v983 = vld [vmem:[%s244 + $0xf] sm:$0x1]
        %v984 = vld [vmem:[%s244 + $0x1f] sm:$0x1]
        %v985 = vld [vmem:[%s244 + $0x2f] sm:$0x1]
        %v986 = vld [vmem:[%s244 + $0x3f] sm:$0x1]
        %v987 = vadd.f32 %v979, %v983
        %v988 = vadd.f32 %v980, %v984
        %v989 = vadd.f32 %v981, %v985
        %v990 = vadd.f32 %v982, %v986
        %v995 = vrot.slane %v988, 7
        %v996 = vsel %vm540, %v995, %v987
        %v997 = vsel %vm542, %v995, %v996
        %v998 = vrot.slane %v989, 6
        %v999 = vsel %vm545, %v998, %v997
        %v1000 = vsel %vm547, %v998, %v999
        %v1001 = vrot.slane %v990, 5
        %v1002 = vsel %vm550, %v1001, %v1000
        %v1003 = vsel %vm552, %v1001, %v1002
        %1004 = vrot.lane.b32.xlu0 %v1003, 1
        %v1005 = vpop.permute.xlu0 %1004
        %1007 = vst.msk [vmem:[#allocation3 + $0x8] sm:$0xf] %vm772, %v1005
        %v1008 = vld [vmem:[#allocation5] ss:$2 sm:$0x3]
        %s1009 = scalar_lea.vmem [#allocation5], 1
        %v1010 = vld [vmem:[%s1009] ss:$2 sm:$0x3]
        %v1011 = vld [vmem:[#allocation3] sm:$0xff]
        %v1013 = vlaneseq
        %v1014 = vshrl.u32 %v1013, 7
        %v1015 = vsub.s32 0, %v1014
        %v1016 = vrot.slane %v1008, %v1015
        %v1017 = vlaneseq
        %v1018 = vshrl.u32 %v1017, 7
        %v1019 = vsub.s32 1, %v1018
        %v1020 = vrot.slane %v1008, %v1019
        %v1021 = vcombine.low %v1016, %v1020
        %v1023 = vmul.f32 %v1011, %v1021
        %v1025 = vcombine.high %v1023, %v1023
        %1027 = vst [vmem:[#allocation4] sm:$0xf] %v1023
        %1028 = vst [vmem:[#allocation4 + $0x8] sm:$0xf] %v1025
        %v1029 = vld [vmem:[#allocation3] sm:$0xff]
        %v1030 = vld [vmem:[#allocation3 + $0x8] sm:$0xf]
        %v1033 = vcombine.high %v1029, %v1029
        %1034 = vrot.lane.b32.xlu0 %v1029, 127
        %v1035 = vpop.permute.xlu0 %1034
        %1036 = vrot.lane.b32.xlu0 %v1033, 127
        %v1037 = vpop.permute.xlu0 %1036
        %1038 = vrot.lane.b32.xlu0 %v1030, 127
        %v1039 = vpop.permute.xlu0 %1038
        %vm1040 = vcmask 1039360
        %v1041 = vsel %vm1040, %v1035, %v1037
        %v1042 = vsel %vm1040, %v1037, %v1039
        %1045 = vst [vmem:[#allocation4 + $0x10] sm:$0xf] %v1041
        %1046 = vst [vmem:[#allocation4 + $0x18] sm:$0xf] %v1042
        %v1047 = vld [vmem:[#allocation3] sm:$0xff]
        %v1048 = vld [vmem:[#allocation3 + $0x8] sm:$0xf]
        %v1050 = vlaneseq
        %v1051 = vshrl.u32 %v1050, 7
        %v1052 = vsub.s32 0, %v1051
        %v1053 = vrot.slane %v1010, %v1052
        %v1054 = vlaneseq
        %v1055 = vshrl.u32 %v1054, 7
        %v1056 = vsub.s32 1, %v1055
        %v1057 = vrot.slane %v1010, %v1056
        %v1058 = vcombine.low %v1053, %v1057
        %1059 = vrot.lane.b32.xlu0 %v1058, 2
        %v1060 = vpop.permute.xlu0 %1059
        %v1061 = vrot.slane %v1060, 4
        %vm1062 = vcmask 15360
        %v1063 = vsel %vm1062, %v1061, %v1060
        %v1066 = vmul.f32 %v1047, %v1063
        %v1067 = vmul.f32 %v1048, %v1061
        %v1070 = vcombine.high %v1066, %v1066
        %1071 = vrot.lane.b32.xlu0 %v1066, 126
        %v1072 = vpop.permute.xlu0 %1071
        %1073 = vrot.lane.b32.xlu0 %v1070, 126
        %v1074 = vpop.permute.xlu0 %1073
        %1075 = vrot.lane.b32.xlu0 %v1067, 126
        %v1076 = vpop.permute.xlu0 %1075
        %vm1077 = vcmask 1031168
        %v1078 = vsel %vm1077, %v1072, %v1074
        %v1079 = vsel %vm1077, %v1074, %v1076
        %1082 = vst [vmem:[#allocation4 + $0x20] sm:$0xf] %v1078
        %1083 = vst [vmem:[#allocation4 + $0x28] sm:$0xf] %v1079
        %v1084 = vld [vmem:[#allocation3] sm:$0xff]
        %v1085 = vld [vmem:[#allocation3 + $0x8] sm:$0xf]
        %1086 = vrot.lane.b32.xlu0 %v1021, 16
        %v1087 = vpop.permute.xlu0 %1086
        %v1088 = vrot.slane %v1087, 4
        %v1089 = vsel %vm518, %v1088, %v1087
        %v1092 = vmul.f32 %v1084, %v1089
        %v1093 = vmul.f32 %v1085, %v1088
        %v1096 = vcombine.high %v1092, %v1092
        %1097 = vrot.lane.b32.xlu0 %v1092, 112
        %v1098 = vpop.permute.xlu0 %1097
        %1099 = vrot.lane.b32.xlu0 %v1096, 112
        %v1100 = vpop.permute.xlu0 %1099
        %1101 = vrot.lane.b32.xlu0 %v1093, 112
        %v1102 = vpop.permute.xlu0 %1101
        %vm1103 = vcmask 916480
        %v1104 = vsel %vm1103, %v1098, %v1100
        %v1105 = vsel %vm1103, %v1100, %v1102
        %1108 = vst [vmem:[#allocation4 + $0x30] sm:$0xf] %v1104
        %1109 = vst [vmem:[#allocation4 + $0x38] sm:$0xf] %v1105
        %v1110 = vld [vmem:[#allocation3] sm:$0xff]
        %v1111 = vld [vmem:[#allocation3 + $0x8] sm:$0xf]
        %v1114 = vcombine.high %v1110, %v1110
        %1115 = vrot.lane.b32.xlu0 %v1110, 111
        %v1116 = vpop.permute.xlu0 %1115
        %1117 = vrot.lane.b32.xlu0 %v1114, 111
        %v1118 = vpop.permute.xlu0 %1117
        %1119 = vrot.lane.b32.xlu0 %v1111, 111
        %v1120 = vpop.permute.xlu0 %1119
        %vm1121 = vcmask 908288
        %v1122 = vsel %vm1121, %v1116, %v1118
        %v1123 = vsel %vm1121, %v1118, %v1120
        %1126 = vst [vmem:[#allocation4 + $0x40] sm:$0xf] %v1122
        %1127 = vst [vmem:[#allocation4 + $0x48] sm:$0xf] %v1123
        %v1128 = vld [vmem:[#allocation3] sm:$0xff]
        %v1129 = vld [vmem:[#allocation3 + $0x8] sm:$0xf]
        %1130 = vrot.lane.b32.xlu0 %v1058, 18
        %v1131 = vpop.permute.xlu0 %1130
        %v1132 = vrot.slane %v1131, 4
        %vm1133 = vcmask 146432
        %v1134 = vsel %vm1133, %v1132, %v1131
        %v1137 = vmul.f32 %v1128, %v1134
        %v1138 = vmul.f32 %v1129, %v1132
        %v1141 = vcombine.high %v1137, %v1137
        %1142 = vrot.lane.b32.xlu0 %v1137, 110
        %v1143 = vpop.permute.xlu0 %1142
        %1144 = vrot.lane.b32.xlu0 %v1141, 110
        %v1145 = vpop.permute.xlu0 %1144
        %1146 = vrot.lane.b32.xlu0 %v1138, 110
        %v1147 = vpop.permute.xlu0 %1146
        %vm1148 = vcmask 900096
        %v1149 = vsel %vm1148, %v1143, %v1145
        %v1150 = vsel %vm1148, %v1145, %v1147
        %1153 = vst [vmem:[#allocation4 + $0x50] sm:$0xf] %v1149
        %1154 = vst [vmem:[#allocation4 + $0x58] sm:$0xf] %v1150
        %v1155 = vld [vmem:[#allocation3] sm:$0xff]
        %v1156 = vld [vmem:[#allocation3 + $0x8] sm:$0xf]
        %1157 = vrot.lane.b32.xlu0 %v1021, 32
        %v1158 = vpop.permute.xlu0 %1157
        %v1159 = vrot.slane %v1158, 4
        %vm1160 = vcmask 261120
        %v1161 = vsel %vm1160, %v1159, %v1158
        %v1164 = vmul.f32 %v1155, %v1161
        %v1165 = vmul.f32 %v1156, %v1159
        %v1168 = vcombine.high %v1164, %v1164
        %1169 = vrot.lane.b32.xlu0 %v1164, 96
        %v1170 = vpop.permute.xlu0 %1169
        %1171 = vrot.lane.b32.xlu0 %v1168, 96
        %v1172 = vpop.permute.xlu0 %1171
        %1173 = vrot.lane.b32.xlu0 %v1165, 96
        %v1174 = vpop.permute.xlu0 %1173
        %vm1175 = vcmask 785408
        %v1176 = vsel %vm1175, %v1170, %v1172
        %v1177 = vsel %vm1175, %v1172, %v1174
        %1180 = vst [vmem:[#allocation4 + $0x60] sm:$0xf] %v1176
        %1181 = vst [vmem:[#allocation4 + $0x68] sm:$0xf] %v1177
        %v1182 = vld [vmem:[#allocation3] sm:$0xff]
        %v1183 = vld [vmem:[#allocation3 + $0x8] sm:$0xf]
        %v1186 = vcombine.high %v1182, %v1182
        %1187 = vrot.lane.b32.xlu0 %v1182, 95
        %v1188 = vpop.permute.xlu0 %1187
        %1189 = vrot.lane.b32.xlu0 %v1186, 95
        %v1190 = vpop.permute.xlu0 %1189
        %1191 = vrot.lane.b32.xlu0 %v1183, 95
        %v1192 = vpop.permute.xlu0 %1191
        %vm1193 = vcmask 777216
        %v1194 = vsel %vm1193, %v1188, %v1190
        %v1195 = vsel %vm1193, %v1190, %v1192
        %1198 = vst [vmem:[#allocation4 + $0x70] sm:$0xf] %v1194
        %1199 = vst [vmem:[#allocation4 + $0x78] sm:$0xf] %v1195
        %v1200 = vld [vmem:[#allocation3] sm:$0xff]
        %v1201 = vld [vmem:[#allocation3 + $0x8] sm:$0xf]
        %1202 = vrot.lane.b32.xlu0 %v1058, 34
        %v1203 = vpop.permute.xlu0 %1202
        %v1204 = vrot.slane %v1203, 4
        %vm1205 = vcmask 277504
        %v1206 = vsel %vm1205, %v1204, %v1203
        %v1209 = vmul.f32 %v1200, %v1206
        %v1210 = vmul.f32 %v1201, %v1204
        %v1213 = vcombine.high %v1209, %v1209
        %1214 = vrot.lane.b32.xlu0 %v1209, 94
        %v1215 = vpop.permute.xlu0 %1214
        %1216 = vrot.lane.b32.xlu0 %v1213, 94
        %v1217 = vpop.permute.xlu0 %1216
        %1218 = vrot.lane.b32.xlu0 %v1210, 94
        %v1219 = vpop.permute.xlu0 %1218
        %vm1220 = vcmask 769024
        %v1221 = vsel %vm1220, %v1215, %v1217
        %v1222 = vsel %vm1220, %v1217, %v1219
        %1225 = vst [vmem:[#allocation4 + $0x80] sm:$0xf] %v1221
        %1226 = vst [vmem:[#allocation4 + $0x88] sm:$0xf] %v1222
        %v1227 = vld [vmem:[%s2] sm:$0xff]
        %v1228 = vld [vmem:[#allocation4] sm:$0xff]
        %v1229 = vld [vmem:[#allocation4 + $0x8] sm:$0xff]
        %v1230 = vld [vmem:[#allocation4 + $0x10] sm:$0xff]
        %v1231 = vld [vmem:[#allocation4 + $0x18] sm:$0xff]
        %v1232 = vld [vmem:[#allocation4 + $0x20] sm:$0xff]
        %v1233 = vld [vmem:[#allocation4 + $0x28] sm:$0xff]
        %v1234 = vld [vmem:[#allocation4 + $0x30] sm:$0xff]
        %v1235 = vld [vmem:[#allocation4 + $0x38] sm:$0xff]
        %v1236 = vld [vmem:[#allocation4 + $0x40] sm:$0xff]
        %v1237 = vld [vmem:[#allocation4 + $0x48] sm:$0xff]
        %v1238 = vld [vmem:[#allocation4 + $0x50] sm:$0xff]
        %v1239 = vld [vmem:[#allocation4 + $0x58] sm:$0xff]
        %v1240 = vld [vmem:[#allocation4 + $0x60] sm:$0xff]
        %v1241 = vld [vmem:[#allocation4 + $0x68] sm:$0xff]
        %v1242 = vld [vmem:[#allocation4 + $0x70] sm:$0xff]
        %v1243 = vld [vmem:[#allocation4 + $0x78] sm:$0xff]
        %v1244 = vld [vmem:[#allocation4 + $0x80] sm:$0xff]
        %v1245 = vld [vmem:[#allocation4 + $0x88] sm:$0xff]
        %vm1246 = vcmask 588800
        %v1248 = vsel %vm1246, %v1227, 0
        %1250 = vmatprep.subr.mxu0 0.0
        %1251 = vmatpush1.msra.mxu0 0.0
        %1252 = vmatprep.subr.mxu0 0.0
        %1253 = vmatpush1.msra.mxu0 0.0
        %1254 = vmatprep.subr.mxu0 0.0
        %1255 = vmatpush1.msra.mxu0 0.0
        %1256 = vmatprep.subr.mxu0 0.0
        %1257 = vmatpush1.msra.mxu0 0.0
        %1258 = vmatprep.subr.mxu0 0.0
        %1259 = vmatpush1.msra.mxu0 0.0
        %1260 = vmatprep.subr.mxu0 0.0
        %1261 = vmatpush1.msra.mxu0 0.0
        %1262 = vmatprep.subr.mxu0 0.0
        %1263 = vmatpush1.msra.mxu0 0.0
        %1264 = vmatprep.subr.mxu0 %v1245
        %1265 = vmatpush1.msra.mxu0 %v1244
        %1266 = vmatprep.subr.mxu0 %v1243
        %1267 = vmatpush1.msra.mxu0 %v1242
        %1268 = vmatprep.subr.mxu0 %v1241
        %1269 = vmatpush1.msra.mxu0 %v1240
        %1270 = vmatprep.subr.mxu0 %v1239
        %1271 = vmatpush1.msra.mxu0 %v1238
        %1272 = vmatprep.subr.mxu0 %v1237
        %1273 = vmatpush1.msra.mxu0 %v1236
        %1274 = vmatprep.subr.mxu0 %v1235
        %1275 = vmatpush1.msra.mxu0 %v1234
        %1276 = vmatprep.subr.mxu0 %v1233
        %1277 = vmatpush1.msra.mxu0 %v1232
        %1278 = vmatprep.subr.mxu0 %v1231
        %1279 = vmatpush1.msra.mxu0 %v1230
        %1280 = vmatprep.subr.mxu0 %v1229
        %1281 = vmatpush1.msra.mxu0 %v1228
        %1282 = vmatprep.subr.mxu0 0.0
        %1283 = vmatpush2.msra.mxu0 0.0
        %1284 = vmatprep.subr.mxu0 0.0
        %1285 = vmatpush2.msra.mxu0 0.0
        %1286 = vmatprep.subr.mxu0 0.0
        %1287 = vmatpush2.msra.mxu0 0.0
        %1288 = vmatprep.subr.mxu0 0.0
        %1289 = vmatpush2.msra.mxu0 0.0
        %1290 = vmatprep.subr.mxu0 0.0
        %1291 = vmatpush2.msra.mxu0 0.0
        %1292 = vmatprep.subr.mxu0 0.0
        %1293 = vmatpush2.msra.mxu0 0.0
        %1294 = vmatprep.subr.mxu0 0.0
        %1295 = vmatpush2.msra.mxu0 0.0
        %1296 = vmatprep.subr.mxu0 0.0
        %1297 = vmatpush2.msra.mxu0 0.0
        %1298 = vmatprep.subr.mxu0 0.0
        %1299 = vmatpush2.msra.mxu0 0.0
        %1300 = vmatprep.subr.mxu0 0.0
        %1301 = vmatpush2.msra.mxu0 0.0
        %1302 = vmatprep.subr.mxu0 0.0
        %1303 = vmatpush2.msra.mxu0 0.0
        %1304 = vmatprep.subr.mxu0 0.0
        %1305 = vmatpush2.msra.mxu0 0.0
        %1306 = vmatprep.subr.mxu0 0.0
        %1307 = vmatpush2.msra.mxu0 0.0
        %1308 = vmatprep.subr.mxu0 0.0
        %1309 = vmatpush2.msra.mxu0 0.0
        %1310 = vmatprep.subr.mxu0 0.0
        %1311 = vmatpush2.msra.mxu0 0.0
        %1312 = vmatprep.subr.mxu0 0.0
        %1313 = vmatpush2.msra.mxu0 0.0
        %1314 = vmatprep.mubr.f32.mxu0 0.0
        %1315 = vmatmul.mubr.f32.gmra.mxu0 %v1248
        %v1316 = vpop.f32.mrf.mxu0
        %v1317 = vadd.f32 0.0, %v1316
        %v1318 = vpop.f32.mrf.mxu0
        %v1319 = vadd.f32 0.0, %v1318
        %1320 = vdwg.mxu0
        %s1321 = smul.u32 %s23, 2
        %s1322 = smul.addr %s1321, 8
        %s1323 = scalar_lea.vmem [#allocation13], %s1322
        %1324 = vst [vmem:[%s1323] sm:$0xff] %v1317
        %1325 = vst [vmem:[%s1323 + $0x8] sm:$0xff] %v1319
        %v1326 = vld [vmem:[#allocation6] sm:$0xff]
        %v1327 = vadd.f32 %v1317, %v1319
        %1328 = vadd.xlane.f32.xlu0 %v1327
        %v1329 = vpop.xlane.xlu0 %1328
        %v1330 = vadd.f32 %v1326, %v1329
        %vm1331 = vcmask 7168
        %1332 = vst.msk [vmem:[#allocation6] sm:$0xff] %vm1331, %v1330
        %v1333 = vld [vmem:[#allocation7] sm:$0xff]
        %v1334 = vmul.f32 %v1317, %v1317
        %v1335 = vmul.f32 %v1319, %v1319
        %v1336 = vadd.f32 %v1334, %v1335
        %1337 = vadd.xlane.f32.xlu0 %v1336
        %v1338 = vpop.xlane.xlu0 %1337
        %v1339 = vadd.f32 %v1333, %v1338
        %1340 = vst.msk [vmem:[#allocation7] sm:$0xff] %vm1331, %v1339
        %p1341 = scmp.eq.s32.totalorder %s23, 1
        // Predicated region
        $region53: #{tpu_custom_call.1} parent=39 // pred_check
          %p1342 = pneg %p1341
        $region54: #{tpu_custom_call.1} parent=39 // pred_check_branch
          %1344 = sbr.rel (%p1342) target = $region56
        $region55: #{tpu_custom_call.1} parent=39 // pred_region
          %v1345 = vld [vmem:[#allocation6] sm:$0xff]
          %v1346 = vmul.f32 %v1345, 0.001953125
          %v1347 = vld [vmem:[#allocation7] sm:$0xff]
          %v1348 = vmul.f32 %v1347, 0.001953125
          %v1349 = vmul.f32 %v1346, %v1346
          %v1350 = vsub.f32 %v1348, %v1349
          %v1351 = vadd.f32 %v1350, 1e-05
          %v1352 = vrsqrt.pop %v1351
          %v1353 = vld [vmem:[%s3] sm:$0xff]
          %v1354 = vmul.f32 %v1353, %v1352
          %v1355 = vld [vmem:[%s4] sm:$0xff]
          %v1356 = vmul.f32 %v1346, %v1354
          %v1357 = vsub.f32 %v1355, %v1356
          %v1358 = vld [vmem:[#allocation13] sm:$0xff]
          %v1359 = vld [vmem:[#allocation13 + $0x8] sm:$0xff]
          %v1360 = vld [vmem:[#allocation13 + $0x10] sm:$0xff]
          %v1361 = vld [vmem:[#allocation13 + $0x18] sm:$0xff]
          %1363 = vset.pattern.permute.xlu0 0
          %1364 = vperm.xlu0 %1363, %v1354
          %v1365 = vpop.permute.xlu0 %1364
          %v1367 = vmul.f32 %v1358, %v1365
          %v1368 = vmul.f32 %v1359, %v1365
          %v1369 = vmul.f32 %v1360, %v1365
          %v1370 = vmul.f32 %v1361, %v1365
          %1372 = vset.pattern.permute.xlu0 0
          %1373 = vperm.xlu0 %1372, %v1357
          %v1374 = vpop.permute.xlu0 %1373
          %v1376 = vadd.f32 %v1367, %v1374
          %v1377 = vadd.f32 %v1368, %v1374
          %v1378 = vadd.f32 %v1369, %v1374
          %v1379 = vadd.f32 %v1370, %v1374
          %v1380 = vmax.f32 %v1376, 0.0
          %v1381 = vmax.f32 %v1377, 0.0
          %v1382 = vmax.f32 %v1378, 0.0
          %v1383 = vmax.f32 %v1379, 0.0
          %1384 = vst [vmem:[#allocation13] sm:$0xff] %v1380
          %1385 = vst [vmem:[#allocation13 + $0x8] sm:$0xff] %v1381
          %1386 = vst [vmem:[#allocation13 + $0x10] sm:$0xff] %v1382
          %1387 = vst [vmem:[#allocation13 + $0x18] sm:$0xff] %v1383
        $region56: #{tpu_custom_call.1} parent=39 // pred_fallthru
          _
        // Predicated region
        $region57: #{tpu_custom_call.1} parent=39 // pred_check
          %p1388 = pneg %p151
        $region58: #{tpu_custom_call.1} parent=39 // pred_check_branch
          %1390 = sbr.rel (%p1388) target = $region60
        $region59: #{tpu_custom_call.1} parent=39 // pred_region
          %s1392 = ssub.s32 512, 512
          %1393 = vsyncadd [#allocation10], %s1392
          %s1394 = sshll.u32 [#allocation13], 4
          %s1395 = int_to_ptr.vmem [resolvable:$true] %s1394
          %1400 = dma.vmem_to_hbm [thread:$0]  %s1395, 512, %s5, [#allocation10], 256, 256, 16
        $region60: #{tpu_custom_call.1} parent=39 // pred_fallthru
          _
        // Predicated region
        $region61: #{tpu_custom_call.1} parent=39 // pred_check
          %p1401 = pneg %p151
        $region62: #{tpu_custom_call.1} parent=39 // pred_check_branch
          %1403 = sbr.rel (%p1401) target = $region64
        $region63: #{tpu_custom_call.1} parent=39 // pred_region
          %1404 = dma.done [#allocation10], 512
        $region64: #{tpu_custom_call.1} parent=39 // pred_fallthru
          _
      $region40: #{tpu_custom_call.1} parent=5 // pred_fallthru
        _
      %p1405 = scmp.le.s32.totalorder 2, %s18
      // Predicated region
      $region65: #{tpu_custom_call.1} parent=5 // pred_check
        %p1406 = pneg %p1405
      $region66: #{tpu_custom_call.1} parent=5 // pred_check_branch
        %1408 = sbr.rel (%p1406) target = $region68
      $region67: #{tpu_custom_call.1} parent=5 // pred_region
        %s1409 = ssub.s32 %s18, 2
      $region68: #{tpu_custom_call.1} parent=5 // pred_fallthru
        _
    $region6: #{tpu_custom_call.1} parent=1 // loop_footer
      %s22 = sadd.s32 1, %s18
    $region7: #{tpu_custom_call.1} parent=1 // loop_footer_branch
      %17 = sbr.rel target = $region3
    $region8: #{tpu_custom_call.1} parent=1 // loop_exit
      _
    %1410 = vsyncpa [#allocation9], 1
    %s1411 = scalar_lea.sflag [#allocation9], 1
    %1412 = vsyncpa %s1411, 1
    %1413 = vsyncpa [#allocation12], 1
    %s1414 = scalar_lea.sflag [#allocation12], 1
    %1415 = vsyncpa %s1414, 1
    %1416 = vsyncpa [#allocation10], 1
    %s1417 = scalar_lea.sflag [#allocation10], 1
    %1418 = vsyncpa %s1417, 1

</llo_original>
